<compile_context>
chip_gen: v5e
topology: v5e:2x2
jax: 0.10.0
libtpu: 0.0.40
codegen_flags: <defaults>
</compile_context>

<pallas_src>
import functools

import jax
import jax.numpy as jnp
import numpy as np
from jax.experimental import pallas as pl
from jax.experimental.pallas import tpu as pltpu


def _round_up(x, m):
    return ((x + m - 1) // m) * m


def _pad_to(a, shape):
    return jnp.pad(a, [(0, t - s) for s, t in zip(a.shape, shape)])


def _vae_kernel(seg_bounds, ml_width, out_valid, matmul_dtype,
                x_ref, w1_ref, b1_ref, wbig_ref, bbig_ref, wseg_ref, bseg_ref,
                out_ref, mulogvar_ref):
    # ---------------- encoder fc1 ----------------
    h1 = jnp.dot(x_ref[...], w1_ref[...],
                 preferred_element_type=jnp.float32) + b1_ref[...]
    h1 = jnp.maximum(h1, 0.0)

    # One wide matmul from h1:
    #   columns [0, ml_width)        -> [mu | logvar] packed tight
    #   columns [ml_width, ...)      -> decoder in_linear pre-activation
    #                                   (W21 @ Wdin fused, eval path z = mu)
    # TODO(synk): training-mode reparameterize() samples N(0,1) noise; eval path (z = mu) implemented.
    y = jnp.dot(h1.astype(matmul_dtype), wbig_ref[...],
                preferred_element_type=jnp.float32) + bbig_ref[...]
    mulogvar_ref[...] = y[:, :ml_width]          # lane-aligned split (128-mult)
    h2 = jnp.maximum(y[:, ml_width:], 0.0)

    # ---------------- fused per-segment decoder Linears + ReLU ----------------
    r = jnp.dot(h2.astype(matmul_dtype), wseg_ref[...],
                preferred_element_type=jnp.float32) + bseg_ref[...]
    r = jnp.maximum(r, 0.0)

    # ---------------- per-segment LogSoftmax (dim=1) via lane masks ----------------
    # No unaligned slices / concat: segment max and logsumexp are computed with
    # static lane-index masks and broadcast back over the full-vreg block.
    col = jax.lax.broadcasted_iota(jnp.int32, r.shape, 1)

    m_b = jnp.zeros_like(r)
    for (s, e) in seg_bounds:
        mask = (col >= s) & (col < e)
        # r >= 0 after ReLU, so filling masked-out lanes with 0 is an exact max.
        m_i = jnp.max(jnp.where(mask, r, 0.0), axis=1, keepdims=True)
        m_b = jnp.where(mask, m_i, m_b)

    e_all = jnp.exp(r - m_b)

    lse_b = jnp.zeros_like(r)
    for (s, e) in seg_bounds:
        mask = (col >= s) & (col < e)
        s_i = jnp.sum(jnp.where(mask, e_all, 0.0), axis=1, keepdims=True)
        lse_b = jnp.where(mask, jnp.log(s_i), lse_b)

    # Single lane-dense store of the original (unpadded) output width.
    out_ref[...] = (r - m_b - lse_b)[:, :out_valid]


def pack_params(params, matmul_dtype=jnp.bfloat16):
    """Pack raw (PyTorch-layout-transposed) params into the padded/fused kernel layout.

    All fusions (W21 @ Wdin, weight concatenations) are computed in f32; only
    the final matmul operands are cast to `matmul_dtype`.
    """
    f32 = jnp.float32
    in_dim, hid_dim = params["w1"].shape
    code_dim = params["w21"].shape[1]
    dec_code_dim = params["wdin"].shape[1]
    out_dim = params["wseg"].shape[1]

    in_pad = _round_up(in_dim, 128)
    hid_pad = _round_up(hid_dim, 128)
    ml_pad = _round_up(2 * code_dim, 128)       # [mu | logvar] packed tight
    dec_pad = _round_up(dec_code_dim, 128)
    out_pad = _round_up(out_dim, 128)

    w1 = _pad_to(params["w1"].astype(f32), (in_pad, hid_pad))
    b1 = _pad_to(params["b1"].astype(f32), (1, hid_pad))

    # [mu | logvar] columns packed tight (no 128-lane gap between them).
    w2 = jnp.zeros((hid_pad, ml_pad), f32)
    w2 = w2.at[:hid_dim, :code_dim].set(params["w21"].astype(f32))
    w2 = w2.at[:hid_dim, code_dim:2 * code_dim].set(params["w22"].astype(f32))
    b2 = jnp.zeros((1, ml_pad), f32)
    b2 = b2.at[:, :code_dim].set(params["b21"].astype(f32))
    b2 = b2.at[:, code_dim:2 * code_dim].set(params["b22"].astype(f32))

    # Algebraic fusion of encoder-mu -> decoder in_linear (eval path z = mu).
    wfused = params["w21"].astype(f32) @ params["wdin"].astype(f32)
    bfused = params["b21"].astype(f32) @ params["wdin"].astype(f32) + params["bdin"].astype(f32)
    wfused = _pad_to(wfused, (hid_pad, dec_pad))
    bfused = _pad_to(bfused, (1, dec_pad))

    wbig = jnp.concatenate([w2, wfused], axis=1)       # (hid_pad, ml_pad + dec_pad)
    bbig = jnp.concatenate([b2, bfused], axis=1)

    wseg = _pad_to(params["wseg"].astype(f32), (dec_pad, out_pad))
    bseg = _pad_to(params["bseg"].astype(f32), (1, out_pad))

    cast = lambda w: w.astype(matmul_dtype)
    return dict(
        w1=cast(w1), b1=b1, wbig=cast(wbig), bbig=bbig, wseg=cast(wseg), bseg=bseg,
        dims=dict(in_dim=in_dim, in_pad=in_pad, code_dim=code_dim,
                  ml_pad=ml_pad, dec_pad=dec_pad, out_dim=out_dim, out_pad=out_pad),
    )


def utf8_vae_forward(x, packed, seg_dims, *, block_b=512,
                     vmem_limit_bytes=48 * 1024 * 1024):
    """Run the fused UTF8VAE forward pass on TPU via pallas_call.

    block_b: max batch tile (512 default; weights stay VMEM-resident, only the
    x / out / mulogvar row blocks are pipelined).
    """
    dims = packed["dims"]
    in_dim, in_pad = dims["in_dim"], dims["in_pad"]
    code_dim, ml_pad = dims["code_dim"], dims["ml_pad"]
    out_dim = dims["out_dim"]
    matmul_dtype = packed["w1"].dtype

    B = x.shape[0]
    assert x.shape[1] == in_dim
    assert int(sum(seg_dims)) == out_dim

    # Static segment boundaries for the per-decoder LogSoftmax.
    seg_bounds, off = [], 0
    for d in seg_dims:
        seg_bounds.append((off, off + d))
        off += d
    seg_bounds = tuple(seg_bounds)

    # Batch tile: as big as block_b allows, but keep >=2 grid steps when the
    # batch is large enough so v7x's two TensorCores both get work.
    tb = int(min(block_b, _round_up(B, 8)))
    if B >= 16:
        tb = int(min(tb, _round_up((B + 1) // 2, 8)))
    b_pad = _round_up(B, tb)

    # Cast x to the matmul dtype in the wrapper (halves x DMA bytes for bf16)
    # and pad batch rows / feature lanes to full-vreg shapes.
    xp = x.astype(matmul_dtype)
    xp = jnp.pad(xp, ((0, b_pad - B), (0, in_pad - in_dim)))

    weights = (packed["w1"], packed["b1"], packed["wbig"], packed["bbig"],
               packed["wseg"], packed["bseg"])

    def row_spec(dim):
        return pl.BlockSpec((tb, dim), lambda i: (i, 0))

    def const_spec(arr):
        return pl.BlockSpec(arr.shape, lambda i: (0,) * arr.ndim)

    in_specs = [row_spec(in_pad)] + [const_spec(w) for w in weights]

    out_shapes = (
        jax.ShapeDtypeStruct((b_pad, out_dim), jnp.float32),   # decoded log-probs
        jax.ShapeDtypeStruct((b_pad, ml_pad), jnp.float32),    # [mu | logvar] packed
    )
    out_specs = [row_spec(out_dim), row_spec(ml_pad)]

    out, mulogvar = pl.pallas_call(
        functools.partial(_vae_kernel, seg_bounds, ml_pad, out_dim, matmul_dtype),
        out_shape=out_shapes,
        grid=(b_pad // tb,),
        in_specs=in_specs,
        out_specs=out_specs,
        compiler_params=pltpu.CompilerParams(
            dimension_semantics=("parallel",),       # batch split across TCs (v7x)
            vmem_limit_bytes=vmem_limit_bytes),
    )(xp, *weights)

    mu = mulogvar[:B, :code_dim]
    logvar = mulogvar[:B, code_dim:2 * code_dim]
    return out[:B], mu, logvar


def init_params(key, in_code_dim, hid_dim, code_dim, segments):
    """Deterministic PyTorch-default-style init (U(-1/sqrt(fan_in), 1/sqrt(fan_in)))."""
    seg_dims = [4, 2 ** 8, 2 ** 6, 2 ** 6, 2 ** 6][:segments + 1]
    dec_code_dim = 4 + 2 ** 8 + (segments - 1) * 2 ** 6
    assert sum(seg_dims) == dec_code_dim

    def linear(k, fan_in, fan_out):
        kw, kb = jax.random.split(k)
        bound = 1.0 / float(np.sqrt(fan_in))
        w = jax.random.uniform(kw, (fan_in, fan_out), jnp.float32, -bound, bound)
        b = jax.random.uniform(kb, (1, fan_out), jnp.float32, -bound, bound)
        return w, b

    keys = jax.random.split(key, 4 + len(seg_dims))
    w1, b1 = linear(keys[0], in_code_dim, hid_dim)
    w21, b21 = linear(keys[1], hid_dim, code_dim)
    w22, b22 = linear(keys[2], hid_dim, code_dim)
    wdin, bdin = linear(keys[3], code_dim, dec_code_dim)

    ws, bs = [], []
    for i, d in enumerate(seg_dims):
        w, b = linear(keys[4 + i], dec_code_dim, d)
        ws.append(w)
        bs.append(b)
    wseg = jnp.concatenate(ws, axis=1)
    bseg = jnp.concatenate(bs, axis=1)

    params = dict(w1=w1, b1=b1, w21=w21, b21=b21, w22=w22, b22=b22,
                  wdin=wdin, bdin=bdin, wseg=wseg, bseg=bseg)
    return params, seg_dims


def reference_forward(x, params, seg_dims):
    """Pure-JAX reference of the same (eval-mode) forward pass."""
    h1 = jnp.maximum(x @ params["w1"] + params["b1"], 0.0)
    mu = h1 @ params["w21"] + params["b21"]
    logvar = h1 @ params["w22"] + params["b22"]
    z = mu
    h2 = jnp.maximum(z @ params["wdin"] + params["bdin"], 0.0)
    r = jnp.maximum(h2 @ params["wseg"] + params["bseg"], 0.0)
    outs, off = [], 0
    for d in seg_dims:
        seg = r[:, off:off + d]
        outs.append(jax.nn.log_softmax(seg, axis=1))
        off += d
    return jnp.concatenate(outs, axis=1), mu, logvar


if __name__ == "__main__":
    # Small shapes consistent with the module: segments=4 fixes the decoder
    # feature layout to 4 + 256 + 3*64 = 452; keep hidden/code dims small.
    B = 8
    segments = 4
    in_code_dim = 4 + 2 ** 8 + (segments - 1) * 2 ** 6   # 452
    hid_dim = 64
    code_dim = 32

    key = jax.random.PRNGKey(0)
    kx, kp = jax.random.split(key)
    params, seg_dims = init_params(kp, in_code_dim, hid_dim, code_dim, segments)
    x = jax.random.uniform(kx, (B, in_code_dim), jnp.float32)

    ref_out, ref_mu, ref_logvar = reference_forward(x, params, seg_dims)

    # --- exactness check: f32 MXU operands ---
    packed_f32 = pack_params(params, matmul_dtype=jnp.float32)
    out, mu, logvar = utf8_vae_forward(x, packed_f32, seg_dims)
    jax.block_until_ready((out, mu, logvar))

    np.testing.assert_allclose(np.asarray(out), np.asarray(ref_out), rtol=1e-4, atol=1e-4)
    np.testing.assert_allclose(np.asarray(mu), np.asarray(ref_mu), rtol=1e-4, atol=1e-4)
    np.testing.assert_allclose(np.asarray(logvar), np.asarray(ref_logvar), rtol=1e-4, atol=1e-4)

    # --- default perf path: bf16 MXU operands, f32 accumulation ---
    packed_bf16 = pack_params(params)   # bf16 by default
    out_b, mu_b, logvar_b = utf8_vae_forward(x, packed_bf16, seg_dims)
    jax.block_until_ready((out_b, mu_b, logvar_b))

    np.testing.assert_allclose(np.asarray(out_b), np.asarray(ref_out), rtol=1e-1, atol=1e-1)
    np.testing.assert_allclose(np.asarray(mu_b), np.asarray(ref_mu), rtol=1e-1, atol=1e-1)
    np.testing.assert_allclose(np.asarray(logvar_b), np.asarray(ref_logvar), rtol=1e-1, atol=1e-1)

    print("KERNEL_OK")
</pallas_src>

<mosaic_0001>
module attributes {stable_mosaic.version = 11 : i64} {
  func.func @_vae_kernel(%arg0: i32, %arg1: memref<8x512xf32, #tpu.memory_space<vmem>>, %arg2: memref<512x128xf32, #tpu.memory_space<vmem>>, %arg3: memref<1x128xf32, #tpu.memory_space<vmem>>, %arg4: memref<128x640xf32, #tpu.memory_space<vmem>>, %arg5: memref<1x640xf32, #tpu.memory_space<vmem>>, %arg6: memref<512x512xf32, #tpu.memory_space<vmem>>, %arg7: memref<1x512xf32, #tpu.memory_space<vmem>>, %arg8: memref<8x452xf32, #tpu.memory_space<vmem>>, %arg9: memref<8x128xf32, #tpu.memory_space<vmem>>) attributes {dimension_semantics = [#tpu.dimension_semantics<parallel>], iteration_bounds = array<i64: 1>, scalar_prefetch = 0 : i64, scratch_operands = 0 : i64, tpu.core_type = #tpu.core_type<tc>, window_params = [{transform_indices = @transform_0, window_bounds = array<i64: 8, 512>}, {pipeline_mode = #tpu.pipeline_mode<synchronous>, transform_indices = @transform_1, window_bounds = array<i64: 512, 128>}, {pipeline_mode = #tpu.pipeline_mode<synchronous>, transform_indices = @transform_2, window_bounds = array<i64: 1, 128>}, {pipeline_mode = #tpu.pipeline_mode<synchronous>, transform_indices = @transform_3, window_bounds = array<i64: 128, 640>}, {pipeline_mode = #tpu.pipeline_mode<synchronous>, transform_indices = @transform_4, window_bounds = array<i64: 1, 640>}, {pipeline_mode = #tpu.pipeline_mode<synchronous>, transform_indices = @transform_5, window_bounds = array<i64: 512, 512>}, {pipeline_mode = #tpu.pipeline_mode<synchronous>, transform_indices = @transform_6, window_bounds = array<i64: 1, 512>}, {transform_indices = @transform_7, window_bounds = array<i64: 8, 452>}, {transform_indices = @transform_8, window_bounds = array<i64: 8, 128>}]} {
    %c0 = arith.constant 0 : index
    %c0_0 = arith.constant 0 : index
    %0 = vector.load %arg1[%c0, %c0_0] : memref<8x512xf32, #tpu.memory_space<vmem>>, vector<8x512xf32>
    %c0_1 = arith.constant 0 : index
    %c0_2 = arith.constant 0 : index
    %1 = vector.load %arg2[%c0_1, %c0_2] : memref<512x128xf32, #tpu.memory_space<vmem>>, vector<512x128xf32>
    %cst = arith.constant dense<0.000000e+00> : vector<8x128xf32>
    %2 = tpu.matmul %0, %1, %cst {dimension_numbers = #tpu.dot_dimension_numbers<[1], [0], [0], [1], [0, 0, 1, 1], [], []>} : vector<8x512xf32>, vector<512x128xf32>, vector<8x128xf32> -> vector<8x128xf32>
    %c0_3 = arith.constant 0 : index
    %c0_4 = arith.constant 0 : index
    %3 = vector.load %arg3[%c0_3, %c0_4] : memref<1x128xf32, #tpu.memory_space<vmem>>, vector<1x128xf32>
    %4 = vector.broadcast %3 : vector<1x128xf32> to vector<8x128xf32>
    %5 = arith.addf %2, %4 : vector<8x128xf32>
    %cst_5 = arith.constant 0.000000e+00 : f32
    %6 = vector.broadcast %cst_5 : f32 to vector<8x128xf32>
    %7 = arith.maximumf %5, %6 : vector<8x128xf32>
    %c0_6 = arith.constant 0 : index
    %c0_7 = arith.constant 0 : index
    %8 = vector.load %arg4[%c0_6, %c0_7] : memref<128x640xf32, #tpu.memory_space<vmem>>, vector<128x640xf32>
    %cst_8 = arith.constant dense<0.000000e+00> : vector<8x640xf32>
    %9 = tpu.matmul %7, %8, %cst_8 {dimension_numbers = #tpu.dot_dimension_numbers<[1], [0], [0], [1], [0, 0, 1, 1], [], []>} : vector<8x128xf32>, vector<128x640xf32>, vector<8x640xf32> -> vector<8x640xf32>
    %c0_9 = arith.constant 0 : index
    %c0_10 = arith.constant 0 : index
    %10 = vector.load %arg5[%c0_9, %c0_10] : memref<1x640xf32, #tpu.memory_space<vmem>>, vector<1x640xf32>
    %11 = vector.broadcast %10 : vector<1x640xf32> to vector<8x640xf32>
    %12 = arith.addf %9, %11 : vector<8x640xf32>
    %13 = vector.extract_strided_slice %12 {offsets = [0, 0], sizes = [8, 128], strides = [1, 1]} : vector<8x640xf32> to vector<8x128xf32>
    %c0_11 = arith.constant 0 : index
    %c0_12 = arith.constant 0 : index
    %14 = vector.load %arg9[%c0_11, %c0_12] : memref<8x128xf32, #tpu.memory_space<vmem>>, vector<8x128xf32>
    tpu.vector_store %arg9[%c0_11, %c0_12], %13 {strides = array<i32>} : memref<8x128xf32, #tpu.memory_space<vmem>>, vector<8x128xf32>,
    %15 = vector.extract_strided_slice %12 {offsets = [0, 128], sizes = [8, 512], strides = [1, 1]} : vector<8x640xf32> to vector<8x512xf32>
    %cst_13 = arith.constant 0.000000e+00 : f32
    %16 = vector.broadcast %cst_13 : f32 to vector<8x512xf32>
    %17 = arith.maximumf %15, %16 : vector<8x512xf32>
    %c0_14 = arith.constant 0 : index
    %c0_15 = arith.constant 0 : index
    %18 = vector.load %arg6[%c0_14, %c0_15] : memref<512x512xf32, #tpu.memory_space<vmem>>, vector<512x512xf32>
    %cst_16 = arith.constant dense<0.000000e+00> : vector<8x512xf32>
    %19 = tpu.matmul %17, %18, %cst_16 {dimension_numbers = #tpu.dot_dimension_numbers<[1], [0], [0], [1], [0, 0, 1, 1], [], []>} : vector<8x512xf32>, vector<512x512xf32>, vector<8x512xf32> -> vector<8x512xf32>
    %c0_17 = arith.constant 0 : index
    %c0_18 = arith.constant 0 : index
    %20 = vector.load %arg7[%c0_17, %c0_18] : memref<1x512xf32, #tpu.memory_space<vmem>>, vector<1x512xf32>
    %21 = vector.broadcast %20 : vector<1x512xf32> to vector<8x512xf32>
    %22 = arith.addf %19, %21 : vector<8x512xf32>
    %cst_19 = arith.constant 0.000000e+00 : f32
    %23 = vector.broadcast %cst_19 : f32 to vector<8x512xf32>
    %24 = arith.maximumf %22, %23 : vector<8x512xf32>
    %25 = tpu.iota {dimensions = array<i32: 1>} : vector<8x512xi32>
    %cst_20 = arith.constant 0.000000e+00 : f32
    %26 = vector.broadcast %cst_20 : f32 to vector<8x512xf32>
    %c0_i32 = arith.constant 0 : i32
    %27 = vector.broadcast %c0_i32 : i32 to vector<8x512xi32>
    %28 = arith.cmpi sge, %25, %27 : vector<8x512xi32>
    %c4_i32 = arith.constant 4 : i32
    %29 = vector.broadcast %c4_i32 : i32 to vector<8x512xi32>
    %30 = arith.cmpi slt, %25, %29 : vector<8x512xi32>
    %31 = arith.andi %28, %30 : vector<8x512xi1>
    %cst_21 = arith.constant 0.000000e+00 : f32
    %32 = vector.broadcast %cst_21 : f32 to vector<8x512xf32>
    %33 = arith.select %31, %24, %32 : vector<8x512xi1>, vector<8x512xf32>
    %cst_22 = arith.constant dense<0xFF800000> : vector<8xf32>
    %34 = vector.multi_reduction <maximumf>, %33, %cst_22 [1] : vector<8x512xf32> to vector<8xf32>
    %35 = vector.shape_cast %34 : vector<8xf32> to vector<8x1xf32>
    %36 = vector.shape_cast %35 : vector<8x1xf32> to vector<8x1xf32>
    %37 = vector.broadcast %36 : vector<8x1xf32> to vector<8x512xf32>
    %38 = arith.select %31, %37, %26 : vector<8x512xi1>, vector<8x512xf32>
    %c4_i32_23 = arith.constant 4 : i32
    %39 = vector.broadcast %c4_i32_23 : i32 to vector<8x512xi32>
    %40 = arith.cmpi sge, %25, %39 : vector<8x512xi32>
    %c260_i32 = arith.constant 260 : i32
    %41 = vector.broadcast %c260_i32 : i32 to vector<8x512xi32>
    %42 = arith.cmpi slt, %25, %41 : vector<8x512xi32>
    %43 = arith.andi %40, %42 : vector<8x512xi1>
    %cst_24 = arith.constant 0.000000e+00 : f32
    %44 = vector.broadcast %cst_24 : f32 to vector<8x512xf32>
    %45 = arith.select %43, %24, %44 : vector<8x512xi1>, vector<8x512xf32>
    %cst_25 = arith.constant dense<0xFF800000> : vector<8xf32>
    %46 = vector.multi_reduction <maximumf>, %45, %cst_25 [1] : vector<8x512xf32> to vector<8xf32>
    %47 = vector.shape_cast %46 : vector<8xf32> to vector<8x1xf32>
    %48 = vector.shape_cast %47 : vector<8x1xf32> to vector<8x1xf32>
    %49 = vector.broadcast %48 : vector<8x1xf32> to vector<8x512xf32>
    %50 = arith.select %43, %49, %38 : vector<8x512xi1>, vector<8x512xf32>
    %c260_i32_26 = arith.constant 260 : i32
    %51 = vector.broadcast %c260_i32_26 : i32 to vector<8x512xi32>
    %52 = arith.cmpi sge, %25, %51 : vector<8x512xi32>
    %c324_i32 = arith.constant 324 : i32
    %53 = vector.broadcast %c324_i32 : i32 to vector<8x512xi32>
    %54 = arith.cmpi slt, %25, %53 : vector<8x512xi32>
    %55 = arith.andi %52, %54 : vector<8x512xi1>
    %cst_27 = arith.constant 0.000000e+00 : f32
    %56 = vector.broadcast %cst_27 : f32 to vector<8x512xf32>
    %57 = arith.select %55, %24, %56 : vector<8x512xi1>, vector<8x512xf32>
    %cst_28 = arith.constant dense<0xFF800000> : vector<8xf32>
    %58 = vector.multi_reduction <maximumf>, %57, %cst_28 [1] : vector<8x512xf32> to vector<8xf32>
    %59 = vector.shape_cast %58 : vector<8xf32> to vector<8x1xf32>
    %60 = vector.shape_cast %59 : vector<8x1xf32> to vector<8x1xf32>
    %61 = vector.broadcast %60 : vector<8x1xf32> to vector<8x512xf32>
    %62 = arith.select %55, %61, %50 : vector<8x512xi1>, vector<8x512xf32>
    %c324_i32_29 = arith.constant 324 : i32
    %63 = vector.broadcast %c324_i32_29 : i32 to vector<8x512xi32>
    %64 = arith.cmpi sge, %25, %63 : vector<8x512xi32>
    %c388_i32 = arith.constant 388 : i32
    %65 = vector.broadcast %c388_i32 : i32 to vector<8x512xi32>
    %66 = arith.cmpi slt, %25, %65 : vector<8x512xi32>
    %67 = arith.andi %64, %66 : vector<8x512xi1>
    %cst_30 = arith.constant 0.000000e+00 : f32
    %68 = vector.broadcast %cst_30 : f32 to vector<8x512xf32>
    %69 = arith.select %67, %24, %68 : vector<8x512xi1>, vector<8x512xf32>
    %cst_31 = arith.constant dense<0xFF800000> : vector<8xf32>
    %70 = vector.multi_reduction <maximumf>, %69, %cst_31 [1] : vector<8x512xf32> to vector<8xf32>
    %71 = vector.shape_cast %70 : vector<8xf32> to vector<8x1xf32>
    %72 = vector.shape_cast %71 : vector<8x1xf32> to vector<8x1xf32>
    %73 = vector.broadcast %72 : vector<8x1xf32> to vector<8x512xf32>
    %74 = arith.select %67, %73, %62 : vector<8x512xi1>, vector<8x512xf32>
    %c388_i32_32 = arith.constant 388 : i32
    %75 = vector.broadcast %c388_i32_32 : i32 to vector<8x512xi32>
    %76 = arith.cmpi sge, %25, %75 : vector<8x512xi32>
    %c452_i32 = arith.constant 452 : i32
    %77 = vector.broadcast %c452_i32 : i32 to vector<8x512xi32>
    %78 = arith.cmpi slt, %25, %77 : vector<8x512xi32>
    %79 = arith.andi %76, %78 : vector<8x512xi1>
    %cst_33 = arith.constant 0.000000e+00 : f32
    %80 = vector.broadcast %cst_33 : f32 to vector<8x512xf32>
    %81 = arith.select %79, %24, %80 : vector<8x512xi1>, vector<8x512xf32>
    %cst_34 = arith.constant dense<0xFF800000> : vector<8xf32>
    %82 = vector.multi_reduction <maximumf>, %81, %cst_34 [1] : vector<8x512xf32> to vector<8xf32>
    %83 = vector.shape_cast %82 : vector<8xf32> to vector<8x1xf32>
    %84 = vector.shape_cast %83 : vector<8x1xf32> to vector<8x1xf32>
    %85 = vector.broadcast %84 : vector<8x1xf32> to vector<8x512xf32>
    %86 = arith.select %79, %85, %74 : vector<8x512xi1>, vector<8x512xf32>
    %87 = arith.subf %24, %86 : vector<8x512xf32>
    %88 = math.exp %87 : vector<8x512xf32>
    %cst_35 = arith.constant 0.000000e+00 : f32
    %89 = vector.broadcast %cst_35 : f32 to vector<8x512xf32>
    %c0_i32_36 = arith.constant 0 : i32
    %90 = vector.broadcast %c0_i32_36 : i32 to vector<8x512xi32>
    %91 = arith.cmpi sge, %25, %90 : vector<8x512xi32>
    %c4_i32_37 = arith.constant 4 : i32
    %92 = vector.broadcast %c4_i32_37 : i32 to vector<8x512xi32>
    %93 = arith.cmpi slt, %25, %92 : vector<8x512xi32>
    %94 = arith.andi %91, %93 : vector<8x512xi1>
    %cst_38 = arith.constant 0.000000e+00 : f32
    %95 = vector.broadcast %cst_38 : f32 to vector<8x512xf32>
    %96 = arith.select %94, %88, %95 : vector<8x512xi1>, vector<8x512xf32>
    %cst_39 = arith.constant dense<0.000000e+00> : vector<8xf32>
    %97 = vector.multi_reduction <add>, %96, %cst_39 [1] : vector<8x512xf32> to vector<8xf32>
    %98 = vector.shape_cast %97 : vector<8xf32> to vector<8x1xf32>
    %99 = math.log %98 : vector<8x1xf32>
    %100 = vector.shape_cast %99 : vector<8x1xf32> to vector<8x1xf32>
    %101 = vector.broadcast %100 : vector<8x1xf32> to vector<8x512xf32>
    %102 = arith.select %94, %101, %89 : vector<8x512xi1>, vector<8x512xf32>
    %c4_i32_40 = arith.constant 4 : i32
    %103 = vector.broadcast %c4_i32_40 : i32 to vector<8x512xi32>
    %104 = arith.cmpi sge, %25, %103 : vector<8x512xi32>
    %c260_i32_41 = arith.constant 260 : i32
    %105 = vector.broadcast %c260_i32_41 : i32 to vector<8x512xi32>
    %106 = arith.cmpi slt, %25, %105 : vector<8x512xi32>
    %107 = arith.andi %104, %106 : vector<8x512xi1>
    %cst_42 = arith.constant 0.000000e+00 : f32
    %108 = vector.broadcast %cst_42 : f32 to vector<8x512xf32>
    %109 = arith.select %107, %88, %108 : vector<8x512xi1>, vector<8x512xf32>
    %cst_43 = arith.constant dense<0.000000e+00> : vector<8xf32>
    %110 = vector.multi_reduction <add>, %109, %cst_43 [1] : vector<8x512xf32> to vector<8xf32>
    %111 = vector.shape_cast %110 : vector<8xf32> to vector<8x1xf32>
    %112 = math.log %111 : vector<8x1xf32>
    %113 = vector.shape_cast %112 : vector<8x1xf32> to vector<8x1xf32>
    %114 = vector.broadcast %113 : vector<8x1xf32> to vector<8x512xf32>
    %115 = arith.select %107, %114, %102 : vector<8x512xi1>, vector<8x512xf32>
    %c260_i32_44 = arith.constant 260 : i32
    %116 = vector.broadcast %c260_i32_44 : i32 to vector<8x512xi32>
    %117 = arith.cmpi sge, %25, %116 : vector<8x512xi32>
    %c324_i32_45 = arith.constant 324 : i32
    %118 = vector.broadcast %c324_i32_45 : i32 to vector<8x512xi32>
    %119 = arith.cmpi slt, %25, %118 : vector<8x512xi32>
    %120 = arith.andi %117, %119 : vector<8x512xi1>
    %cst_46 = arith.constant 0.000000e+00 : f32
    %121 = vector.broadcast %cst_46 : f32 to vector<8x512xf32>
    %122 = arith.select %120, %88, %121 : vector<8x512xi1>, vector<8x512xf32>
    %cst_47 = arith.constant dense<0.000000e+00> : vector<8xf32>
    %123 = vector.multi_reduction <add>, %122, %cst_47 [1] : vector<8x512xf32> to vector<8xf32>
    %124 = vector.shape_cast %123 : vector<8xf32> to vector<8x1xf32>
    %125 = math.log %124 : vector<8x1xf32>
    %126 = vector.shape_cast %125 : vector<8x1xf32> to vector<8x1xf32>
    %127 = vector.broadcast %126 : vector<8x1xf32> to vector<8x512xf32>
    %128 = arith.select %120, %127, %115 : vector<8x512xi1>, vector<8x512xf32>
    %c324_i32_48 = arith.constant 324 : i32
    %129 = vector.broadcast %c324_i32_48 : i32 to vector<8x512xi32>
    %130 = arith.cmpi sge, %25, %129 : vector<8x512xi32>
    %c388_i32_49 = arith.constant 388 : i32
    %131 = vector.broadcast %c388_i32_49 : i32 to vector<8x512xi32>
    %132 = arith.cmpi slt, %25, %131 : vector<8x512xi32>
    %133 = arith.andi %130, %132 : vector<8x512xi1>
    %cst_50 = arith.constant 0.000000e+00 : f32
    %134 = vector.broadcast %cst_50 : f32 to vector<8x512xf32>
    %135 = arith.select %133, %88, %134 : vector<8x512xi1>, vector<8x512xf32>
    %cst_51 = arith.constant dense<0.000000e+00> : vector<8xf32>
    %136 = vector.multi_reduction <add>, %135, %cst_51 [1] : vector<8x512xf32> to vector<8xf32>
    %137 = vector.shape_cast %136 : vector<8xf32> to vector<8x1xf32>
    %138 = math.log %137 : vector<8x1xf32>
    %139 = vector.shape_cast %138 : vector<8x1xf32> to vector<8x1xf32>
    %140 = vector.broadcast %139 : vector<8x1xf32> to vector<8x512xf32>
    %141 = arith.select %133, %140, %128 : vector<8x512xi1>, vector<8x512xf32>
    %c388_i32_52 = arith.constant 388 : i32
    %142 = vector.broadcast %c388_i32_52 : i32 to vector<8x512xi32>
    %143 = arith.cmpi sge, %25, %142 : vector<8x512xi32>
    %c452_i32_53 = arith.constant 452 : i32
    %144 = vector.broadcast %c452_i32_53 : i32 to vector<8x512xi32>
    %145 = arith.cmpi slt, %25, %144 : vector<8x512xi32>
    %146 = arith.andi %143, %145 : vector<8x512xi1>
    %cst_54 = arith.constant 0.000000e+00 : f32
    %147 = vector.broadcast %cst_54 : f32 to vector<8x512xf32>
    %148 = arith.select %146, %88, %147 : vector<8x512xi1>, vector<8x512xf32>
    %cst_55 = arith.constant dense<0.000000e+00> : vector<8xf32>
    %149 = vector.multi_reduction <add>, %148, %cst_55 [1] : vector<8x512xf32> to vector<8xf32>
    %150 = vector.shape_cast %149 : vector<8xf32> to vector<8x1xf32>
    %151 = math.log %150 : vector<8x1xf32>
    %152 = vector.shape_cast %151 : vector<8x1xf32> to vector<8x1xf32>
    %153 = vector.broadcast %152 : vector<8x1xf32> to vector<8x512xf32>
    %154 = arith.select %146, %153, %141 : vector<8x512xi1>, vector<8x512xf32>
    %155 = arith.subf %24, %86 : vector<8x512xf32>
    %156 = arith.subf %155, %154 : vector<8x512xf32>
    %157 = vector.extract_strided_slice %156 {offsets = [0, 0], sizes = [8, 452], strides = [1, 1]} : vector<8x512xf32> to vector<8x452xf32>
    %c0_56 = arith.constant 0 : index
    %c0_57 = arith.constant 0 : index
    %158 = vector.load %arg8[%c0_56, %c0_57] : memref<8x452xf32, #tpu.memory_space<vmem>>, vector<8x452xf32>
    tpu.vector_store %arg8[%c0_56, %c0_57], %157 {strides = array<i32>} : memref<8x452xf32, #tpu.memory_space<vmem>>, vector<8x452xf32>,
    return
  }
  func.func @transform_0(%arg0: i32) -> (i32, i32) {
    %c0_i32 = arith.constant 0 : i32
    %c0_i32_0 = arith.constant 0 : i32
    return %arg0, %c0_i32 : i32, i32
  }
  func.func @transform_1(%arg0: i32) -> (i32, i32) {
    %c0_i32 = arith.constant 0 : i32
    %c0_i32_0 = arith.constant 0 : i32
    %c0_i32_1 = arith.constant 0 : i32
    return %c0_i32, %c0_i32_0 : i32, i32
  }
  func.func @transform_2(%arg0: i32) -> (i32, i32) {
    %c0_i32 = arith.constant 0 : i32
    %c0_i32_0 = arith.constant 0 : i32
    %c0_i32_1 = arith.constant 0 : i32
    return %c0_i32, %c0_i32_0 : i32, i32
  }
  func.func @transform_3(%arg0: i32) -> (i32, i32) {
    %c0_i32 = arith.constant 0 : i32
    %c0_i32_0 = arith.constant 0 : i32
    %c0_i32_1 = arith.constant 0 : i32
    return %c0_i32, %c0_i32_0 : i32, i32
  }
  func.func @transform_4(%arg0: i32) -> (i32, i32) {
    %c0_i32 = arith.constant 0 : i32
    %c0_i32_0 = arith.constant 0 : i32
    %c0_i32_1 = arith.constant 0 : i32
    return %c0_i32, %c0_i32_0 : i32, i32
  }
  func.func @transform_5(%arg0: i32) -> (i32, i32) {
    %c0_i32 = arith.constant 0 : i32
    %c0_i32_0 = arith.constant 0 : i32
    %c0_i32_1 = arith.constant 0 : i32
    return %c0_i32, %c0_i32_0 : i32, i32
  }
  func.func @transform_6(%arg0: i32) -> (i32, i32) {
    %c0_i32 = arith.constant 0 : i32
    %c0_i32_0 = arith.constant 0 : i32
    %c0_i32_1 = arith.constant 0 : i32
    return %c0_i32, %c0_i32_0 : i32, i32
  }
  func.func @transform_7(%arg0: i32) -> (i32, i32) {
    %c0_i32 = arith.constant 0 : i32
    %c0_i32_0 = arith.constant 0 : i32
    return %arg0, %c0_i32 : i32, i32
  }
  func.func @transform_8(%arg0: i32) -> (i32, i32) {
    %c0_i32 = arith.constant 0 : i32
    %c0_i32_0 = arith.constant 0 : i32
    return %arg0, %c0_i32 : i32, i32
  }
}

</mosaic_0001>

<llo_original>
// kernel: tpu_custom_call.1
$region0: #{tpu_custom_call.1}
  #allocation0 [shape = 'u32[]', space=smem, size = 0x4, offset = 0x4, fixed_abs, tag = 'smem constant byte address 0x4 - core index']
  #allocation1 [shape = 'u32[72,128]{1,0:T(1,128)}', space=vmem, size = 0x9000, scoped, tag = 'internal scratch']
  %s0 = inlined_call_operand.hbm [shape: f32[8,512], index: 0, kind: input, shape index: {}]
  %s1 = inlined_call_operand.hbm [shape: f32[512,128], index: 1, kind: input, shape index: {}]
  %s2 = inlined_call_operand.vmem [shape: f32[1,128], index: 2, kind: input, shape index: {}]
  %s3 = inlined_call_operand.hbm [shape: f32[128,640], index: 3, kind: input, shape index: {}]
  %s4 = inlined_call_operand.hbm [shape: f32[1,640], index: 4, kind: input, shape index: {}]
  %s5 = inlined_call_operand.hbm [shape: f32[512,512], index: 5, kind: input, shape index: {}]
  %s6 = inlined_call_operand.vmem [shape: f32[1,512], index: 6, kind: input, shape index: {}]
  %s7 = inlined_call_operand.hbm [shape: f32[8,452], index: 7, kind: output, shape index: {0}]
  %s8 = inlined_call_operand.hbm [shape: f32[8,128], index: 8, kind: output, shape index: {1}]
  %9 = xla_tuple %s7, %s8
  %s10 = sld [smem:[#allocation0]]
  $region66: #{tpu_custom_call.1} parent=0
    _
  %s12 = ssub.s32 1, %s10
  %s13 = scalar_select 0, %s12, %s10
  $region1: #{tpu_custom_call.1} parent=0
    #allocation2 [shape = 'u8[16384]{0}', space=vmem, size = 0x4000, scoped, tag = 'input window, operand 0, single buffered']
    #allocation3 [shape = 's32[1]{0}', space=sflag, size = 0x4, scoped, tag = 'scoped memory for tpu_custom_call.1']
    #allocation4 [shape = 's32[1]{0}', space=sflag, size = 0x4, scoped, tag = 'scoped memory for tpu_custom_call.1']
    #allocation5 [shape = 'u8[262144]{0}', space=vmem, size = 0x40000, scoped, tag = 'input window, operand 1, single buffered']
    #allocation6 [shape = 's32[1]{0}', space=sflag, size = 0x4, scoped, tag = 'scoped memory for tpu_custom_call.1']
    #allocation7 [shape = 'u8[327680]{0}', space=vmem, size = 0x50000, scoped, tag = 'input window, operand 3, single buffered']
    #allocation8 [shape = 'u8[2560]{0}', space=vmem, size = 0xc00, scoped, tag = 'input window, operand 4, single buffered']
    #allocation9 [shape = 's32[1]{0}', space=sflag, size = 0x4, scoped, tag = 'scoped memory for tpu_custom_call.1']
    #allocation10 [shape = 'u8[1048576]{0}', space=vmem, size = 0x100000, scoped, tag = 'input window, operand 5, single buffered']
    #allocation11 [shape = 'u8[16384]{0}', space=vmem, size = 0x4000, scoped, tag = 'output window, operand 0, single buffered']
    #allocation12 [shape = 'u8[4096]{0}', space=vmem, size = 0x1000, scoped, tag = 'output window, operand 1, single buffered']
    #allocation13 [shape = 's32[1]{0}', space=sflag, size = 0x4, scoped, tag = 'scoped memory for tpu_custom_call.1']
    %14 = vsyncpa [#allocation3], 0
    %15 = vsyncpa [#allocation6], 0
    %16 = vsyncpa [#allocation9], 0
    %17 = vsyncpa [#allocation4], 0
    %18 = vsyncpa [#allocation13], 0
    // Predicated region
    $region2: #{tpu_custom_call.1} parent=1 // pred_check
      _
    $region3: #{tpu_custom_call.1} parent=1 // pred_check_branch
      %20 = sbr.rel (0) target = $region5
    $region4: #{tpu_custom_call.1} parent=1 // pred_region
      %22 = vsyncadd [#allocation3], 0
      %s24 = sshll.u32 %s0, 4
      %s25 = int_to_ptr.hbm [resolvable:$true] %s24
      %s26 = sshll.u32 [#allocation2], 4
      %s27 = int_to_ptr.vmem [resolvable:$true] %s26
      %29 = dma.hbm_to_vmem [thread:$0]  %s25, 512, %s27, [#allocation3]
    $region5: #{tpu_custom_call.1} parent=1 // pred_fallthru
      _
    // Predicated region
    $region6: #{tpu_custom_call.1} parent=1 // pred_check
      _
    $region7: #{tpu_custom_call.1} parent=1 // pred_check_branch
      %31 = sbr.rel (0) target = $region9
    $region8: #{tpu_custom_call.1} parent=1 // pred_region
      %33 = vsyncadd [#allocation6], 0
      %s34 = sshll.u32 %s1, 4
      %s35 = int_to_ptr.hbm [resolvable:$true] %s34
      %s36 = sshll.u32 [#allocation5], 4
      %s37 = int_to_ptr.vmem [resolvable:$true] %s36
      %42 = dma.hbm_to_vmem [thread:$0]  %s35, 8192, %s37, [#allocation6], 128, 128, 8
    $region9: #{tpu_custom_call.1} parent=1 // pred_fallthru
      _
    // Predicated region
    $region10: #{tpu_custom_call.1} parent=1 // pred_check
      _
    $region11: #{tpu_custom_call.1} parent=1 // pred_check_branch
      %44 = sbr.rel (0) target = $region13
    $region12: #{tpu_custom_call.1} parent=1 // pred_region
      _
    $region13: #{tpu_custom_call.1} parent=1 // pred_fallthru
      _
    // Predicated region
    $region14: #{tpu_custom_call.1} parent=1 // pred_check
      _
    $region15: #{tpu_custom_call.1} parent=1 // pred_check_branch
      %46 = sbr.rel (0) target = $region17
    $region16: #{tpu_custom_call.1} parent=1 // pred_region
      %48 = vsyncadd [#allocation6], 0
      %s49 = sshll.u32 %s3, 4
      %s50 = int_to_ptr.hbm [resolvable:$true] %s49
      %s51 = sshll.u32 [#allocation7], 4
      %s52 = int_to_ptr.vmem [resolvable:$true] %s51
      %57 = dma.hbm_to_vmem [thread:$0]  %s50, 10240, %s52, [#allocation6], 640, 640, 40
    $region17: #{tpu_custom_call.1} parent=1 // pred_fallthru
      _
    // Predicated region
    $region18: #{tpu_custom_call.1} parent=1 // pred_check
      _
    $region19: #{tpu_custom_call.1} parent=1 // pred_check_branch
      %59 = sbr.rel (0) target = $region21
    $region20: #{tpu_custom_call.1} parent=1 // pred_region
      %61 = vsyncadd [#allocation9], 0
      %s63 = sshll.u32 %s4, 4
      %s64 = int_to_ptr.hbm [resolvable:$true] %s63
      %s65 = sshll.u32 [#allocation8], 4
      %s66 = int_to_ptr.vmem [resolvable:$true] %s65
      %68 = dma.hbm_to_vmem [thread:$0]  %s64, 80, %s66, [#allocation9]
    $region21: #{tpu_custom_call.1} parent=1 // pred_fallthru
      _
    // Predicated region
    $region22: #{tpu_custom_call.1} parent=1 // pred_check
      _
    $region23: #{tpu_custom_call.1} parent=1 // pred_check_branch
      %70 = sbr.rel (0) target = $region25
    $region24: #{tpu_custom_call.1} parent=1 // pred_region
      %72 = vsyncadd [#allocation9], 0
      %s73 = sshll.u32 %s5, 4
      %s74 = int_to_ptr.hbm [resolvable:$true] %s73
      %s75 = sshll.u32 [#allocation10], 4
      %s76 = int_to_ptr.vmem [resolvable:$true] %s75
      %81 = dma.hbm_to_vmem [thread:$0]  %s74, 32768, %s76, [#allocation9], 512, 512, 32
    $region25: #{tpu_custom_call.1} parent=1 // pred_fallthru
      _
    // Predicated region
    $region26: #{tpu_custom_call.1} parent=1 // pred_check
      _
    $region27: #{tpu_custom_call.1} parent=1 // pred_check_branch
      %83 = sbr.rel (0) target = $region29
    $region28: #{tpu_custom_call.1} parent=1 // pred_region
      _
    $region29: #{tpu_custom_call.1} parent=1 // pred_fallthru
      _
    // Predicated region
    $region30: #{tpu_custom_call.1} parent=1 // pred_check
      _
    $region31: #{tpu_custom_call.1} parent=1 // pred_check_branch
      %85 = sbr.rel (0) target = $region33
    $region32: #{tpu_custom_call.1} parent=1 // pred_region
      %87 = dma.done [#allocation3], 512
    $region33: #{tpu_custom_call.1} parent=1 // pred_fallthru
      _
    // Predicated region
    $region34: #{tpu_custom_call.1} parent=1 // pred_check
      _
    $region35: #{tpu_custom_call.1} parent=1 // pred_check_branch
      %89 = sbr.rel (0) target = $region37
    $region36: #{tpu_custom_call.1} parent=1 // pred_region
      %91 = dma.done [#allocation6], 8192
    $region37: #{tpu_custom_call.1} parent=1 // pred_fallthru
      _
    // Predicated region
    $region38: #{tpu_custom_call.1} parent=1 // pred_check
      _
    $region39: #{tpu_custom_call.1} parent=1 // pred_check_branch
      %93 = sbr.rel (0) target = $region41
    $region40: #{tpu_custom_call.1} parent=1 // pred_region
      %95 = dma.done [#allocation6], 10240
    $region41: #{tpu_custom_call.1} parent=1 // pred_fallthru
      _
    // Predicated region
    $region42: #{tpu_custom_call.1} parent=1 // pred_check
      _
    $region43: #{tpu_custom_call.1} parent=1 // pred_check_branch
      %97 = sbr.rel (0) target = $region45
    $region44: #{tpu_custom_call.1} parent=1 // pred_region
      %99 = dma.done [#allocation9], 80
    $region45: #{tpu_custom_call.1} parent=1 // pred_fallthru
      _
    // Predicated region
    $region46: #{tpu_custom_call.1} parent=1 // pred_check
      _
    $region47: #{tpu_custom_call.1} parent=1 // pred_check_branch
      %101 = sbr.rel (0) target = $region49
    $region48: #{tpu_custom_call.1} parent=1 // pred_region
      %103 = dma.done [#allocation9], 32768
    $region49: #{tpu_custom_call.1} parent=1 // pred_fallthru
      _
    %v104 = vld [vmem:[#allocation2] sm:$0xff]
    %v105 = vld [vmem:[#allocation2 + $0x8] sm:$0xff]
    %v106 = vld [vmem:[#allocation2 + $0x10] sm:$0xff]
    %v107 = vld [vmem:[#allocation2 + $0x18] sm:$0xff]
    %v108 = vld [vmem:[#allocation5] sm:$0xff]
    %v109 = vld [vmem:[#allocation5 + $0x8] sm:$0xff]
    %v110 = vld [vmem:[#allocation5 + $0x10] sm:$0xff]
    %v111 = vld [vmem:[#allocation5 + $0x18] sm:$0xff]
    %v112 = vld [vmem:[#allocation5 + $0x20] sm:$0xff]
    %v113 = vld [vmem:[#allocation5 + $0x28] sm:$0xff]
    %v114 = vld [vmem:[#allocation5 + $0x30] sm:$0xff]
    %v115 = vld [vmem:[#allocation5 + $0x38] sm:$0xff]
    %v116 = vld [vmem:[#allocation5 + $0x40] sm:$0xff]
    %v117 = vld [vmem:[#allocation5 + $0x48] sm:$0xff]
    %v118 = vld [vmem:[#allocation5 + $0x50] sm:$0xff]
    %v119 = vld [vmem:[#allocation5 + $0x58] sm:$0xff]
    %v120 = vld [vmem:[#allocation5 + $0x60] sm:$0xff]
    %v121 = vld [vmem:[#allocation5 + $0x68] sm:$0xff]
    %v122 = vld [vmem:[#allocation5 + $0x70] sm:$0xff]
    %v123 = vld [vmem:[#allocation5 + $0x78] sm:$0xff]
    %v124 = vld [vmem:[#allocation5 + $0x80] sm:$0xff]
    %v125 = vld [vmem:[#allocation5 + $0x88] sm:$0xff]
    %v126 = vld [vmem:[#allocation5 + $0x90] sm:$0xff]
    %v127 = vld [vmem:[#allocation5 + $0x98] sm:$0xff]
    %v128 = vld [vmem:[#allocation5 + $0xa0] sm:$0xff]
    %v129 = vld [vmem:[#allocation5 + $0xa8] sm:$0xff]
    %v130 = vld [vmem:[#allocation5 + $0xb0] sm:$0xff]
    %v131 = vld [vmem:[#allocation5 + $0xb8] sm:$0xff]
    %v132 = vld [vmem:[#allocation5 + $0xc0] sm:$0xff]
    %v133 = vld [vmem:[#allocation5 + $0xc8] sm:$0xff]
    %v134 = vld [vmem:[#allocation5 + $0xd0] sm:$0xff]
    %v135 = vld [vmem:[#allocation5 + $0xd8] sm:$0xff]
    %v136 = vld [vmem:[#allocation5 + $0xe0] sm:$0xff]
    %v137 = vld [vmem:[#allocation5 + $0xe8] sm:$0xff]
    %v138 = vld [vmem:[#allocation5 + $0xf0] sm:$0xff]
    %v139 = vld [vmem:[#allocation5 + $0xf8] sm:$0xff]
    %v140 = vld [vmem:[#allocation5 + $0x100] sm:$0xff]
    %v141 = vld [vmem:[#allocation5 + $0x108] sm:$0xff]
    %v142 = vld [vmem:[#allocation5 + $0x110] sm:$0xff]
    %v143 = vld [vmem:[#allocation5 + $0x118] sm:$0xff]
    %v144 = vld [vmem:[#allocation5 + $0x120] sm:$0xff]
    %v145 = vld [vmem:[#allocation5 + $0x128] sm:$0xff]
    %v146 = vld [vmem:[#allocation5 + $0x130] sm:$0xff]
    %v147 = vld [vmem:[#allocation5 + $0x138] sm:$0xff]
    %v148 = vld [vmem:[#allocation5 + $0x140] sm:$0xff]
    %v149 = vld [vmem:[#allocation5 + $0x148] sm:$0xff]
    %v150 = vld [vmem:[#allocation5 + $0x150] sm:$0xff]
    %v151 = vld [vmem:[#allocation5 + $0x158] sm:$0xff]
    %v152 = vld [vmem:[#allocation5 + $0x160] sm:$0xff]
    %v153 = vld [vmem:[#allocation5 + $0x168] sm:$0xff]
    %v154 = vld [vmem:[#allocation5 + $0x170] sm:$0xff]
    %v155 = vld [vmem:[#allocation5 + $0x178] sm:$0xff]
    %v156 = vld [vmem:[#allocation5 + $0x180] sm:$0xff]
    %v157 = vld [vmem:[#allocation5 + $0x188] sm:$0xff]
    %v158 = vld [vmem:[#allocation5 + $0x190] sm:$0xff]
    %v159 = vld [vmem:[#allocation5 + $0x198] sm:$0xff]
    %v160 = vld [vmem:[#allocation5 + $0x1a0] sm:$0xff]
    %v161 = vld [vmem:[#allocation5 + $0x1a8] sm:$0xff]
    %v162 = vld [vmem:[#allocation5 + $0x1b0] sm:$0xff]
    %v163 = vld [vmem:[#allocation5 + $0x1b8] sm:$0xff]
    %v164 = vld [vmem:[#allocation5 + $0x1c0] sm:$0xff]
    %v165 = vld [vmem:[#allocation5 + $0x1c8] sm:$0xff]
    %v166 = vld [vmem:[#allocation5 + $0x1d0] sm:$0xff]
    %v167 = vld [vmem:[#allocation5 + $0x1d8] sm:$0xff]
    %v168 = vld [vmem:[#allocation5 + $0x1e0] sm:$0xff]
    %v169 = vld [vmem:[#allocation5 + $0x1e8] sm:$0xff]
    %v170 = vld [vmem:[#allocation5 + $0x1f0] sm:$0xff]
    %v171 = vld [vmem:[#allocation5 + $0x1f8] sm:$0xff]
    %v172 = vld [vmem:[%s2] sm:$0x1]
    %v174 = vperm.slane %v172, 0
    %176 = vmatpush.msra.mxu0 %v123
    %177 = vmatpush.msra.mxu0 %v122
    %178 = vmatpush.msra.mxu0 %v121
    %179 = vmatpush.msra.mxu0 %v120
    %180 = vmatpush.msra.mxu0 %v119
    %181 = vmatpush.msra.mxu0 %v118
    %182 = vmatpush.msra.mxu0 %v117
    %183 = vmatpush.msra.mxu0 %v116
    %184 = vmatpush.msra.mxu0 %v115
    %185 = vmatpush.msra.mxu0 %v114
    %186 = vmatpush.msra.mxu0 %v113
    %187 = vmatpush.msra.mxu0 %v112
    %188 = vmatpush.msra.mxu0 %v111
    %189 = vmatpush.msra.mxu0 %v110
    %190 = vmatpush.msra.mxu0 %v109
    %191 = vmatpush.msra.mxu0 %v108
    %192 = vmatmul.f32.gmra.mxu0 %v104
    %v193 = vpop.f32.mrf.mxu0
    %v194 = vadd.f32 %v174, %v193
    %195 = vdwg.mxu0
    %196 = vmatpush.msra.mxu0 %v139
    %197 = vmatpush.msra.mxu0 %v138
    %198 = vmatpush.msra.mxu0 %v137
    %199 = vmatpush.msra.mxu0 %v136
    %200 = vmatpush.msra.mxu0 %v135
    %201 = vmatpush.msra.mxu0 %v134
    %202 = vmatpush.msra.mxu0 %v133
    %203 = vmatpush.msra.mxu0 %v132
    %204 = vmatpush.msra.mxu0 %v131
    %205 = vmatpush.msra.mxu0 %v130
    %206 = vmatpush.msra.mxu0 %v129
    %207 = vmatpush.msra.mxu0 %v128
    %208 = vmatpush.msra.mxu0 %v127
    %209 = vmatpush.msra.mxu0 %v126
    %210 = vmatpush.msra.mxu0 %v125
    %211 = vmatpush.msra.mxu0 %v124
    %212 = vmatmul.f32.gmra.mxu0 %v105
    %v213 = vpop.f32.mrf.mxu0
    %v214 = vadd.f32 %v194, %v213
    %215 = vdwg.mxu0
    %216 = vmatpush.msra.mxu0 %v155
    %217 = vmatpush.msra.mxu0 %v154
    %218 = vmatpush.msra.mxu0 %v153
    %219 = vmatpush.msra.mxu0 %v152
    %220 = vmatpush.msra.mxu0 %v151
    %221 = vmatpush.msra.mxu0 %v150
    %222 = vmatpush.msra.mxu0 %v149
    %223 = vmatpush.msra.mxu0 %v148
    %224 = vmatpush.msra.mxu0 %v147
    %225 = vmatpush.msra.mxu0 %v146
    %226 = vmatpush.msra.mxu0 %v145
    %227 = vmatpush.msra.mxu0 %v144
    %228 = vmatpush.msra.mxu0 %v143
    %229 = vmatpush.msra.mxu0 %v142
    %230 = vmatpush.msra.mxu0 %v141
    %231 = vmatpush.msra.mxu0 %v140
    %232 = vmatmul.f32.gmra.mxu0 %v106
    %v233 = vpop.f32.mrf.mxu0
    %v234 = vadd.f32 %v214, %v233
    %235 = vdwg.mxu0
    %236 = vmatpush.msra.mxu0 %v171
    %237 = vmatpush.msra.mxu0 %v170
    %238 = vmatpush.msra.mxu0 %v169
    %239 = vmatpush.msra.mxu0 %v168
    %240 = vmatpush.msra.mxu0 %v167
    %241 = vmatpush.msra.mxu0 %v166
    %242 = vmatpush.msra.mxu0 %v165
    %243 = vmatpush.msra.mxu0 %v164
    %244 = vmatpush.msra.mxu0 %v163
    %245 = vmatpush.msra.mxu0 %v162
    %246 = vmatpush.msra.mxu0 %v161
    %247 = vmatpush.msra.mxu0 %v160
    %248 = vmatpush.msra.mxu0 %v159
    %249 = vmatpush.msra.mxu0 %v158
    %250 = vmatpush.msra.mxu0 %v157
    %251 = vmatpush.msra.mxu0 %v156
    %252 = vmatmul.f32.gmra.mxu0 %v107
    %v253 = vpop.f32.mrf.mxu0
    %v254 = vadd.f32 %v234, %v253
    %255 = vdwg.mxu0
    %v256 = vmax.f32 %v254, 0.0
    %v257 = vld [vmem:[#allocation7] sm:$0xff]
    %v258 = vld [vmem:[#allocation7 + $0x8] sm:$0xff]
    %v259 = vld [vmem:[#allocation7 + $0x10] sm:$0xff]
    %v260 = vld [vmem:[#allocation7 + $0x18] sm:$0xff]
    %v261 = vld [vmem:[#allocation7 + $0x20] sm:$0xff]
    %v262 = vld [vmem:[#allocation7 + $0x28] sm:$0xff]
    %v263 = vld [vmem:[#allocation7 + $0x30] sm:$0xff]
    %v264 = vld [vmem:[#allocation7 + $0x38] sm:$0xff]
    %v265 = vld [vmem:[#allocation7 + $0x40] sm:$0xff]
    %v266 = vld [vmem:[#allocation7 + $0x48] sm:$0xff]
    %v267 = vld [vmem:[#allocation7 + $0x50] sm:$0xff]
    %v268 = vld [vmem:[#allocation7 + $0x58] sm:$0xff]
    %v269 = vld [vmem:[#allocation7 + $0x60] sm:$0xff]
    %v270 = vld [vmem:[#allocation7 + $0x68] sm:$0xff]
    %v271 = vld [vmem:[#allocation7 + $0x70] sm:$0xff]
    %v272 = vld [vmem:[#allocation7 + $0x78] sm:$0xff]
    %v273 = vld [vmem:[#allocation7 + $0x80] sm:$0xff]
    %v274 = vld [vmem:[#allocation7 + $0x88] sm:$0xff]
    %v275 = vld [vmem:[#allocation7 + $0x90] sm:$0xff]
    %v276 = vld [vmem:[#allocation7 + $0x98] sm:$0xff]
    %v277 = vld [vmem:[#allocation7 + $0xa0] sm:$0xff]
    %v278 = vld [vmem:[#allocation7 + $0xa8] sm:$0xff]
    %v279 = vld [vmem:[#allocation7 + $0xb0] sm:$0xff]
    %v280 = vld [vmem:[#allocation7 + $0xb8] sm:$0xff]
    %v281 = vld [vmem:[#allocation7 + $0xc0] sm:$0xff]
    %v282 = vld [vmem:[#allocation7 + $0xc8] sm:$0xff]
    %v283 = vld [vmem:[#allocation7 + $0xd0] sm:$0xff]
    %v284 = vld [vmem:[#allocation7 + $0xd8] sm:$0xff]
    %v285 = vld [vmem:[#allocation7 + $0xe0] sm:$0xff]
    %v286 = vld [vmem:[#allocation7 + $0xe8] sm:$0xff]
    %v287 = vld [vmem:[#allocation7 + $0xf0] sm:$0xff]
    %v288 = vld [vmem:[#allocation7 + $0xf8] sm:$0xff]
    %v289 = vld [vmem:[#allocation7 + $0x100] sm:$0xff]
    %v290 = vld [vmem:[#allocation7 + $0x108] sm:$0xff]
    %v291 = vld [vmem:[#allocation7 + $0x110] sm:$0xff]
    %v292 = vld [vmem:[#allocation7 + $0x118] sm:$0xff]
    %v293 = vld [vmem:[#allocation7 + $0x120] sm:$0xff]
    %v294 = vld [vmem:[#allocation7 + $0x128] sm:$0xff]
    %v295 = vld [vmem:[#allocation7 + $0x130] sm:$0xff]
    %v296 = vld [vmem:[#allocation7 + $0x138] sm:$0xff]
    %v297 = vld [vmem:[#allocation7 + $0x140] sm:$0xff]
    %v298 = vld [vmem:[#allocation7 + $0x148] sm:$0xff]
    %v299 = vld [vmem:[#allocation7 + $0x150] sm:$0xff]
    %v300 = vld [vmem:[#allocation7 + $0x158] sm:$0xff]
    %v301 = vld [vmem:[#allocation7 + $0x160] sm:$0xff]
    %v302 = vld [vmem:[#allocation7 + $0x168] sm:$0xff]
    %v303 = vld [vmem:[#allocation7 + $0x170] sm:$0xff]
    %v304 = vld [vmem:[#allocation7 + $0x178] sm:$0xff]
    %v305 = vld [vmem:[#allocation7 + $0x180] sm:$0xff]
    %v306 = vld [vmem:[#allocation7 + $0x188] sm:$0xff]
    %v307 = vld [vmem:[#allocation7 + $0x190] sm:$0xff]
    %v308 = vld [vmem:[#allocation7 + $0x198] sm:$0xff]
    %v309 = vld [vmem:[#allocation7 + $0x1a0] sm:$0xff]
    %v310 = vld [vmem:[#allocation7 + $0x1a8] sm:$0xff]
    %v311 = vld [vmem:[#allocation7 + $0x1b0] sm:$0xff]
    %v312 = vld [vmem:[#allocation7 + $0x1b8] sm:$0xff]
    %v313 = vld [vmem:[#allocation7 + $0x1c0] sm:$0xff]
    %v314 = vld [vmem:[#allocation7 + $0x1c8] sm:$0xff]
    %v315 = vld [vmem:[#allocation7 + $0x1d0] sm:$0xff]
    %v316 = vld [vmem:[#allocation7 + $0x1d8] sm:$0xff]
    %v317 = vld [vmem:[#allocation7 + $0x1e0] sm:$0xff]
    %v318 = vld [vmem:[#allocation7 + $0x1e8] sm:$0xff]
    %v319 = vld [vmem:[#allocation7 + $0x1f0] sm:$0xff]
    %v320 = vld [vmem:[#allocation7 + $0x1f8] sm:$0xff]
    %v321 = vld [vmem:[#allocation7 + $0x200] sm:$0xff]
    %v322 = vld [vmem:[#allocation7 + $0x208] sm:$0xff]
    %v323 = vld [vmem:[#allocation7 + $0x210] sm:$0xff]
    %v324 = vld [vmem:[#allocation7 + $0x218] sm:$0xff]
    %v325 = vld [vmem:[#allocation7 + $0x220] sm:$0xff]
    %v326 = vld [vmem:[#allocation7 + $0x228] sm:$0xff]
    %v327 = vld [vmem:[#allocation7 + $0x230] sm:$0xff]
    %v328 = vld [vmem:[#allocation7 + $0x238] sm:$0xff]
    %v329 = vld [vmem:[#allocation7 + $0x240] sm:$0xff]
    %v330 = vld [vmem:[#allocation7 + $0x248] sm:$0xff]
    %v331 = vld [vmem:[#allocation7 + $0x250] sm:$0xff]
    %v332 = vld [vmem:[#allocation7 + $0x258] sm:$0xff]
    %v333 = vld [vmem:[#allocation7 + $0x260] sm:$0xff]
    %v334 = vld [vmem:[#allocation7 + $0x268] sm:$0xff]
    %v335 = vld [vmem:[#allocation7 + $0x270] sm:$0xff]
    %v336 = vld [vmem:[#allocation7 + $0x278] sm:$0xff]
    %v337 = vld [vmem:[#allocation8] sm:$0x1f]
    %v339 = vperm.slane %v337, 0
    %v340 = vperm.slane %v337, 1
    %v341 = vperm.slane %v337, 2
    %v342 = vperm.slane %v337, 3
    %v343 = vperm.slane %v337, 4
    %349 = vmatpush.msra.mxu0 %v332
    %350 = vmatpush.msra.mxu0 %v327
    %351 = vmatpush.msra.mxu0 %v322
    %352 = vmatpush.msra.mxu0 %v317
    %353 = vmatpush.msra.mxu0 %v312
    %354 = vmatpush.msra.mxu0 %v307
    %355 = vmatpush.msra.mxu0 %v302
    %356 = vmatpush.msra.mxu0 %v297
    %357 = vmatpush.msra.mxu0 %v292
    %358 = vmatpush.msra.mxu0 %v287
    %359 = vmatpush.msra.mxu0 %v282
    %360 = vmatpush.msra.mxu0 %v277
    %361 = vmatpush.msra.mxu0 %v272
    %362 = vmatpush.msra.mxu0 %v267
    %363 = vmatpush.msra.mxu0 %v262
    %364 = vmatpush.msra.mxu0 %v257
    %365 = vmatmul.f32.gmra.mxu0 %v256
    %v366 = vpop.f32.mrf.mxu0
    %v367 = vadd.f32 %v339, %v366
    %368 = vdwg.mxu0
    %369 = vmatpush.msra.mxu0 %v333
    %370 = vmatpush.msra.mxu0 %v328
    %371 = vmatpush.msra.mxu0 %v323
    %372 = vmatpush.msra.mxu0 %v318
    %373 = vmatpush.msra.mxu0 %v313
    %374 = vmatpush.msra.mxu0 %v308
    %375 = vmatpush.msra.mxu0 %v303
    %376 = vmatpush.msra.mxu0 %v298
    %377 = vmatpush.msra.mxu0 %v293
    %378 = vmatpush.msra.mxu0 %v288
    %379 = vmatpush.msra.mxu0 %v283
    %380 = vmatpush.msra.mxu0 %v278
    %381 = vmatpush.msra.mxu0 %v273
    %382 = vmatpush.msra.mxu0 %v268
    %383 = vmatpush.msra.mxu0 %v263
    %384 = vmatpush.msra.mxu0 %v258
    %385 = vmatmul.f32.gmra.mxu0 %v256
    %v386 = vpop.f32.mrf.mxu0
    %v387 = vadd.f32 %v340, %v386
    %388 = vdwg.mxu0
    %389 = vmatpush.msra.mxu0 %v334
    %390 = vmatpush.msra.mxu0 %v329
    %391 = vmatpush.msra.mxu0 %v324
    %392 = vmatpush.msra.mxu0 %v319
    %393 = vmatpush.msra.mxu0 %v314
    %394 = vmatpush.msra.mxu0 %v309
    %395 = vmatpush.msra.mxu0 %v304
    %396 = vmatpush.msra.mxu0 %v299
    %397 = vmatpush.msra.mxu0 %v294
    %398 = vmatpush.msra.mxu0 %v289
    %399 = vmatpush.msra.mxu0 %v284
    %400 = vmatpush.msra.mxu0 %v279
    %401 = vmatpush.msra.mxu0 %v274
    %402 = vmatpush.msra.mxu0 %v269
    %403 = vmatpush.msra.mxu0 %v264
    %404 = vmatpush.msra.mxu0 %v259
    %405 = vmatmul.f32.gmra.mxu0 %v256
    %v406 = vpop.f32.mrf.mxu0
    %v407 = vadd.f32 %v341, %v406
    %408 = vdwg.mxu0
    %409 = vmatpush.msra.mxu0 %v335
    %410 = vmatpush.msra.mxu0 %v330
    %411 = vmatpush.msra.mxu0 %v325
    %412 = vmatpush.msra.mxu0 %v320
    %413 = vmatpush.msra.mxu0 %v315
    %414 = vmatpush.msra.mxu0 %v310
    %415 = vmatpush.msra.mxu0 %v305
    %416 = vmatpush.msra.mxu0 %v300
    %417 = vmatpush.msra.mxu0 %v295
    %418 = vmatpush.msra.mxu0 %v290
    %419 = vmatpush.msra.mxu0 %v285
    %420 = vmatpush.msra.mxu0 %v280
    %421 = vmatpush.msra.mxu0 %v275
    %422 = vmatpush.msra.mxu0 %v270
    %423 = vmatpush.msra.mxu0 %v265
    %424 = vmatpush.msra.mxu0 %v260
    %425 = vmatmul.f32.gmra.mxu0 %v256
    %v426 = vpop.f32.mrf.mxu0
    %v427 = vadd.f32 %v342, %v426
    %428 = vdwg.mxu0
    %429 = vmatpush.msra.mxu0 %v336
    %430 = vmatpush.msra.mxu0 %v331
    %431 = vmatpush.msra.mxu0 %v326
    %432 = vmatpush.msra.mxu0 %v321
    %433 = vmatpush.msra.mxu0 %v316
    %434 = vmatpush.msra.mxu0 %v311
    %435 = vmatpush.msra.mxu0 %v306
    %436 = vmatpush.msra.mxu0 %v301
    %437 = vmatpush.msra.mxu0 %v296
    %438 = vmatpush.msra.mxu0 %v291
    %439 = vmatpush.msra.mxu0 %v286
    %440 = vmatpush.msra.mxu0 %v281
    %441 = vmatpush.msra.mxu0 %v276
    %442 = vmatpush.msra.mxu0 %v271
    %443 = vmatpush.msra.mxu0 %v266
    %444 = vmatpush.msra.mxu0 %v261
    %445 = vmatmul.f32.gmra.mxu0 %v256
    %v446 = vpop.f32.mrf.mxu0
    %v447 = vadd.f32 %v343, %v446
    %448 = vdwg.mxu0
    %449 = vst [vmem:[#allocation12] sm:$0xff] %v367
    %v450 = vmax.f32 %v387, 0.0
    %v451 = vmax.f32 %v407, 0.0
    %v452 = vmax.f32 %v427, 0.0
    %v453 = vmax.f32 %v447, 0.0
    %v454 = vld [vmem:[#allocation10] sm:$0xff]
    %v455 = vld [vmem:[#allocation10 + $0x8] sm:$0xff]
    %v456 = vld [vmem:[#allocation10 + $0x10] sm:$0xff]
    %v457 = vld [vmem:[#allocation10 + $0x18] sm:$0xff]
    %v458 = vld [vmem:[#allocation10 + $0x20] sm:$0xff]
    %v459 = vld [vmem:[#allocation10 + $0x28] sm:$0xff]
    %v460 = vld [vmem:[#allocation10 + $0x30] sm:$0xff]
    %v461 = vld [vmem:[#allocation10 + $0x38] sm:$0xff]
    %v462 = vld [vmem:[#allocation10 + $0x40] sm:$0xff]
    %v463 = vld [vmem:[#allocation10 + $0x48] sm:$0xff]
    %v464 = vld [vmem:[#allocation10 + $0x50] sm:$0xff]
    %v465 = vld [vmem:[#allocation10 + $0x58] sm:$0xff]
    %v466 = vld [vmem:[#allocation10 + $0x60] sm:$0xff]
    %v467 = vld [vmem:[#allocation10 + $0x68] sm:$0xff]
    %v468 = vld [vmem:[#allocation10 + $0x70] sm:$0xff]
    %v469 = vld [vmem:[#allocation10 + $0x78] sm:$0xff]
    %v470 = vld [vmem:[#allocation10 + $0x80] sm:$0xff]
    %v471 = vld [vmem:[#allocation10 + $0x88] sm:$0xff]
    %v472 = vld [vmem:[#allocation10 + $0x90] sm:$0xff]
    %v473 = vld [vmem:[#allocation10 + $0x98] sm:$0xff]
    %v474 = vld [vmem:[#allocation10 + $0xa0] sm:$0xff]
    %v475 = vld [vmem:[#allocation10 + $0xa8] sm:$0xff]
    %v476 = vld [vmem:[#allocation10 + $0xb0] sm:$0xff]
    %v477 = vld [vmem:[#allocation10 + $0xb8] sm:$0xff]
    %v478 = vld [vmem:[#allocation10 + $0xc0] sm:$0xff]
    %v479 = vld [vmem:[#allocation10 + $0xc8] sm:$0xff]
    %v480 = vld [vmem:[#allocation10 + $0xd0] sm:$0xff]
    %v481 = vld [vmem:[#allocation10 + $0xd8] sm:$0xff]
    %v482 = vld [vmem:[#allocation10 + $0xe0] sm:$0xff]
    %v483 = vld [vmem:[#allocation10 + $0xe8] sm:$0xff]
    %v484 = vld [vmem:[#allocation10 + $0xf0] sm:$0xff]
    %v485 = vld [vmem:[#allocation10 + $0xf8] sm:$0xff]
    %v486 = vld [vmem:[#allocation10 + $0x100] sm:$0xff]
    %v487 = vld [vmem:[#allocation10 + $0x108] sm:$0xff]
    %v488 = vld [vmem:[#allocation10 + $0x110] sm:$0xff]
    %v489 = vld [vmem:[#allocation10 + $0x118] sm:$0xff]
    %v490 = vld [vmem:[#allocation10 + $0x120] sm:$0xff]
    %v491 = vld [vmem:[#allocation10 + $0x128] sm:$0xff]
    %v492 = vld [vmem:[#allocation10 + $0x130] sm:$0xff]
    %v493 = vld [vmem:[#allocation10 + $0x138] sm:$0xff]
    %v494 = vld [vmem:[#allocation10 + $0x140] sm:$0xff]
    %v495 = vld [vmem:[#allocation10 + $0x148] sm:$0xff]
    %v496 = vld [vmem:[#allocation10 + $0x150] sm:$0xff]
    %v497 = vld [vmem:[#allocation10 + $0x158] sm:$0xff]
    %v498 = vld [vmem:[#allocation10 + $0x160] sm:$0xff]
    %v499 = vld [vmem:[#allocation10 + $0x168] sm:$0xff]
    %v500 = vld [vmem:[#allocation10 + $0x170] sm:$0xff]
    %v501 = vld [vmem:[#allocation10 + $0x178] sm:$0xff]
    %v502 = vld [vmem:[#allocation10 + $0x180] sm:$0xff]
    %v503 = vld [vmem:[#allocation10 + $0x188] sm:$0xff]
    %v504 = vld [vmem:[#allocation10 + $0x190] sm:$0xff]
    %v505 = vld [vmem:[#allocation10 + $0x198] sm:$0xff]
    %v506 = vld [vmem:[#allocation10 + $0x1a0] sm:$0xff]
    %v507 = vld [vmem:[#allocation10 + $0x1a8] sm:$0xff]
    %v508 = vld [vmem:[#allocation10 + $0x1b0] sm:$0xff]
    %v509 = vld [vmem:[#allocation10 + $0x1b8] sm:$0xff]
    %v510 = vld [vmem:[#allocation10 + $0x1c0] sm:$0xff]
    %v511 = vld [vmem:[#allocation10 + $0x1c8] sm:$0xff]
    %v512 = vld [vmem:[#allocation10 + $0x1d0] sm:$0xff]
    %v513 = vld [vmem:[#allocation10 + $0x1d8] sm:$0xff]
    %v514 = vld [vmem:[#allocation10 + $0x1e0] sm:$0xff]
    %v515 = vld [vmem:[#allocation10 + $0x1e8] sm:$0xff]
    %v516 = vld [vmem:[#allocation10 + $0x1f0] sm:$0xff]
    %v517 = vld [vmem:[#allocation10 + $0x1f8] sm:$0xff]
    %v518 = vld [vmem:[#allocation10 + $0x200] sm:$0xff]
    %v519 = vld [vmem:[#allocation10 + $0x208] sm:$0xff]
    %v520 = vld [vmem:[#allocation10 + $0x210] sm:$0xff]
    %v521 = vld [vmem:[#allocation10 + $0x218] sm:$0xff]
    %v522 = vld [vmem:[#allocation10 + $0x220] sm:$0xff]
    %v523 = vld [vmem:[#allocation10 + $0x228] sm:$0xff]
    %v524 = vld [vmem:[#allocation10 + $0x230] sm:$0xff]
    %v525 = vld [vmem:[#allocation10 + $0x238] sm:$0xff]
    %v526 = vld [vmem:[#allocation10 + $0x240] sm:$0xff]
    %v527 = vld [vmem:[#allocation10 + $0x248] sm:$0xff]
    %v528 = vld [vmem:[#allocation10 + $0x250] sm:$0xff]
    %v529 = vld [vmem:[#allocation10 + $0x258] sm:$0xff]
    %v530 = vld [vmem:[#allocation10 + $0x260] sm:$0xff]
    %v531 = vld [vmem:[#allocation10 + $0x268] sm:$0xff]
    %v532 = vld [vmem:[#allocation10 + $0x270] sm:$0xff]
    %v533 = vld [vmem:[#allocation10 + $0x278] sm:$0xff]
    %v534 = vld [vmem:[#allocation10 + $0x280] sm:$0xff]
    %v535 = vld [vmem:[#allocation10 + $0x288] sm:$0xff]
    %v536 = vld [vmem:[#allocation10 + $0x290] sm:$0xff]
    %v537 = vld [vmem:[#allocation10 + $0x298] sm:$0xff]
    %v538 = vld [vmem:[#allocation10 + $0x2a0] sm:$0xff]
    %v539 = vld [vmem:[#allocation10 + $0x2a8] sm:$0xff]
    %v540 = vld [vmem:[#allocation10 + $0x2b0] sm:$0xff]
    %v541 = vld [vmem:[#allocation10 + $0x2b8] sm:$0xff]
    %v542 = vld [vmem:[#allocation10 + $0x2c0] sm:$0xff]
    %v543 = vld [vmem:[#allocation10 + $0x2c8] sm:$0xff]
    %v544 = vld [vmem:[#allocation10 + $0x2d0] sm:$0xff]
    %v545 = vld [vmem:[#allocation10 + $0x2d8] sm:$0xff]
    %v546 = vld [vmem:[#allocation10 + $0x2e0] sm:$0xff]
    %v547 = vld [vmem:[#allocation10 + $0x2e8] sm:$0xff]
    %v548 = vld [vmem:[#allocation10 + $0x2f0] sm:$0xff]
    %v549 = vld [vmem:[#allocation10 + $0x2f8] sm:$0xff]
    %v550 = vld [vmem:[#allocation10 + $0x300] sm:$0xff]
    %v551 = vld [vmem:[#allocation10 + $0x308] sm:$0xff]
    %v552 = vld [vmem:[#allocation10 + $0x310] sm:$0xff]
    %v553 = vld [vmem:[#allocation10 + $0x318] sm:$0xff]
    %v554 = vld [vmem:[#allocation10 + $0x320] sm:$0xff]
    %v555 = vld [vmem:[#allocation10 + $0x328] sm:$0xff]
    %v556 = vld [vmem:[#allocation10 + $0x330] sm:$0xff]
    %v557 = vld [vmem:[#allocation10 + $0x338] sm:$0xff]
    %v558 = vld [vmem:[#allocation10 + $0x340] sm:$0xff]
    %v559 = vld [vmem:[#allocation10 + $0x348] sm:$0xff]
    %v560 = vld [vmem:[#allocation10 + $0x350] sm:$0xff]
    %v561 = vld [vmem:[#allocation10 + $0x358] sm:$0xff]
    %v562 = vld [vmem:[#allocation10 + $0x360] sm:$0xff]
    %v563 = vld [vmem:[#allocation10 + $0x368] sm:$0xff]
    %v564 = vld [vmem:[#allocation10 + $0x370] sm:$0xff]
    %v565 = vld [vmem:[#allocation10 + $0x378] sm:$0xff]
    %v566 = vld [vmem:[#allocation10 + $0x380] sm:$0xff]
    %v567 = vld [vmem:[#allocation10 + $0x388] sm:$0xff]
    %v568 = vld [vmem:[#allocation10 + $0x390] sm:$0xff]
    %v569 = vld [vmem:[#allocation10 + $0x398] sm:$0xff]
    %v570 = vld [vmem:[#allocation10 + $0x3a0] sm:$0xff]
    %v571 = vld [vmem:[#allocation10 + $0x3a8] sm:$0xff]
    %v572 = vld [vmem:[#allocation10 + $0x3b0] sm:$0xff]
    %v573 = vld [vmem:[#allocation10 + $0x3b8] sm:$0xff]
    %v574 = vld [vmem:[#allocation10 + $0x3c0] sm:$0xff]
    %v575 = vld [vmem:[#allocation10 + $0x3c8] sm:$0xff]
    %v576 = vld [vmem:[#allocation10 + $0x3d0] sm:$0xff]
    %v577 = vld [vmem:[#allocation10 + $0x3d8] sm:$0xff]
    %v578 = vld [vmem:[#allocation10 + $0x3e0] sm:$0xff]
    %v579 = vld [vmem:[#allocation10 + $0x3e8] sm:$0xff]
    %v580 = vld [vmem:[#allocation10 + $0x3f0] sm:$0xff]
    %v581 = vld [vmem:[#allocation10 + $0x3f8] sm:$0xff]
    %v582 = vld [vmem:[#allocation10 + $0x400] sm:$0xff]
    %v583 = vld [vmem:[#allocation10 + $0x408] sm:$0xff]
    %v584 = vld [vmem:[#allocation10 + $0x410] sm:$0xff]
    %v585 = vld [vmem:[#allocation10 + $0x418] sm:$0xff]
    %v586 = vld [vmem:[#allocation10 + $0x420] sm:$0xff]
    %v587 = vld [vmem:[#allocation10 + $0x428] sm:$0xff]
    %v588 = vld [vmem:[#allocation10 + $0x430] sm:$0xff]
    %v589 = vld [vmem:[#allocation10 + $0x438] sm:$0xff]
    %v590 = vld [vmem:[#allocation10 + $0x440] sm:$0xff]
    %v591 = vld [vmem:[#allocation10 + $0x448] sm:$0xff]
    %v592 = vld [vmem:[#allocation10 + $0x450] sm:$0xff]
    %v593 = vld [vmem:[#allocation10 + $0x458] sm:$0xff]
    %v594 = vld [vmem:[#allocation10 + $0x460] sm:$0xff]
    %v595 = vld [vmem:[#allocation10 + $0x468] sm:$0xff]
    %v596 = vld [vmem:[#allocation10 + $0x470] sm:$0xff]
    %v597 = vld [vmem:[#allocation10 + $0x478] sm:$0xff]
    %v598 = vld [vmem:[#allocation10 + $0x480] sm:$0xff]
    %v599 = vld [vmem:[#allocation10 + $0x488] sm:$0xff]
    %v600 = vld [vmem:[#allocation10 + $0x490] sm:$0xff]
    %v601 = vld [vmem:[#allocation10 + $0x498] sm:$0xff]
    %v602 = vld [vmem:[#allocation10 + $0x4a0] sm:$0xff]
    %v603 = vld [vmem:[#allocation10 + $0x4a8] sm:$0xff]
    %v604 = vld [vmem:[#allocation10 + $0x4b0] sm:$0xff]
    %v605 = vld [vmem:[#allocation10 + $0x4b8] sm:$0xff]
    %v606 = vld [vmem:[#allocation10 + $0x4c0] sm:$0xff]
    %v607 = vld [vmem:[#allocation10 + $0x4c8] sm:$0xff]
    %v608 = vld [vmem:[#allocation10 + $0x4d0] sm:$0xff]
    %v609 = vld [vmem:[#allocation10 + $0x4d8] sm:$0xff]
    %v610 = vld [vmem:[#allocation10 + $0x4e0] sm:$0xff]
    %v611 = vld [vmem:[#allocation10 + $0x4e8] sm:$0xff]
    %v612 = vld [vmem:[#allocation10 + $0x4f0] sm:$0xff]
    %v613 = vld [vmem:[#allocation10 + $0x4f8] sm:$0xff]
    %v614 = vld [vmem:[#allocation10 + $0x500] sm:$0xff]
    %v615 = vld [vmem:[#allocation10 + $0x508] sm:$0xff]
    %v616 = vld [vmem:[#allocation10 + $0x510] sm:$0xff]
    %v617 = vld [vmem:[#allocation10 + $0x518] sm:$0xff]
    %v618 = vld [vmem:[#allocation10 + $0x520] sm:$0xff]
    %v619 = vld [vmem:[#allocation10 + $0x528] sm:$0xff]
    %v620 = vld [vmem:[#allocation10 + $0x530] sm:$0xff]
    %v621 = vld [vmem:[#allocation10 + $0x538] sm:$0xff]
    %v622 = vld [vmem:[#allocation10 + $0x540] sm:$0xff]
    %v623 = vld [vmem:[#allocation10 + $0x548] sm:$0xff]
    %v624 = vld [vmem:[#allocation10 + $0x550] sm:$0xff]
    %v625 = vld [vmem:[#allocation10 + $0x558] sm:$0xff]
    %v626 = vld [vmem:[#allocation10 + $0x560] sm:$0xff]
    %v627 = vld [vmem:[#allocation10 + $0x568] sm:$0xff]
    %v628 = vld [vmem:[#allocation10 + $0x570] sm:$0xff]
    %v629 = vld [vmem:[#allocation10 + $0x578] sm:$0xff]
    %v630 = vld [vmem:[#allocation10 + $0x580] sm:$0xff]
    %v631 = vld [vmem:[#allocation10 + $0x588] sm:$0xff]
    %v632 = vld [vmem:[#allocation10 + $0x590] sm:$0xff]
    %v633 = vld [vmem:[#allocation10 + $0x598] sm:$0xff]
    %v634 = vld [vmem:[#allocation10 + $0x5a0] sm:$0xff]
    %v635 = vld [vmem:[#allocation10 + $0x5a8] sm:$0xff]
    %v636 = vld [vmem:[#allocation10 + $0x5b0] sm:$0xff]
    %v637 = vld [vmem:[#allocation10 + $0x5b8] sm:$0xff]
    %v638 = vld [vmem:[#allocation10 + $0x5c0] sm:$0xff]
    %v639 = vld [vmem:[#allocation10 + $0x5c8] sm:$0xff]
    %v640 = vld [vmem:[#allocation10 + $0x5d0] sm:$0xff]
    %v641 = vld [vmem:[#allocation10 + $0x5d8] sm:$0xff]
    %v642 = vld [vmem:[#allocation10 + $0x5e0] sm:$0xff]
    %v643 = vld [vmem:[#allocation10 + $0x5e8] sm:$0xff]
    %v644 = vld [vmem:[#allocation10 + $0x5f0] sm:$0xff]
    %v645 = vld [vmem:[#allocation10 + $0x5f8] sm:$0xff]
    %v646 = vld [vmem:[#allocation10 + $0x600] sm:$0xff]
    %v647 = vld [vmem:[#allocation10 + $0x608] sm:$0xff]
    %v648 = vld [vmem:[#allocation10 + $0x610] sm:$0xff]
    %v649 = vld [vmem:[#allocation10 + $0x618] sm:$0xff]
    %v650 = vld [vmem:[#allocation10 + $0x620] sm:$0xff]
    %v651 = vld [vmem:[#allocation10 + $0x628] sm:$0xff]
    %v652 = vld [vmem:[#allocation10 + $0x630] sm:$0xff]
    %v653 = vld [vmem:[#allocation10 + $0x638] sm:$0xff]
    %v654 = vld [vmem:[#allocation10 + $0x640] sm:$0xff]
    %v655 = vld [vmem:[#allocation10 + $0x648] sm:$0xff]
    %v656 = vld [vmem:[#allocation10 + $0x650] sm:$0xff]
    %v657 = vld [vmem:[#allocation10 + $0x658] sm:$0xff]
    %v658 = vld [vmem:[#allocation10 + $0x660] sm:$0xff]
    %v659 = vld [vmem:[#allocation10 + $0x668] sm:$0xff]
    %v660 = vld [vmem:[#allocation10 + $0x670] sm:$0xff]
    %v661 = vld [vmem:[#allocation10 + $0x678] sm:$0xff]
    %v662 = vld [vmem:[#allocation10 + $0x680] sm:$0xff]
    %v663 = vld [vmem:[#allocation10 + $0x688] sm:$0xff]
    %v664 = vld [vmem:[#allocation10 + $0x690] sm:$0xff]
    %v665 = vld [vmem:[#allocation10 + $0x698] sm:$0xff]
    %v666 = vld [vmem:[#allocation10 + $0x6a0] sm:$0xff]
    %v667 = vld [vmem:[#allocation10 + $0x6a8] sm:$0xff]
    %v668 = vld [vmem:[#allocation10 + $0x6b0] sm:$0xff]
    %v669 = vld [vmem:[#allocation10 + $0x6b8] sm:$0xff]
    %v670 = vld [vmem:[#allocation10 + $0x6c0] sm:$0xff]
    %v671 = vld [vmem:[#allocation10 + $0x6c8] sm:$0xff]
    %v672 = vld [vmem:[#allocation10 + $0x6d0] sm:$0xff]
    %v673 = vld [vmem:[#allocation10 + $0x6d8] sm:$0xff]
    %v674 = vld [vmem:[#allocation10 + $0x6e0] sm:$0xff]
    %v675 = vld [vmem:[#allocation10 + $0x6e8] sm:$0xff]
    %v676 = vld [vmem:[#allocation10 + $0x6f0] sm:$0xff]
    %v677 = vld [vmem:[#allocation10 + $0x6f8] sm:$0xff]
    %v678 = vld [vmem:[#allocation10 + $0x700] sm:$0xff]
    %v679 = vld [vmem:[#allocation10 + $0x708] sm:$0xff]
    %v680 = vld [vmem:[#allocation10 + $0x710] sm:$0xff]
    %v681 = vld [vmem:[#allocation10 + $0x718] sm:$0xff]
    %v682 = vld [vmem:[#allocation10 + $0x720] sm:$0xff]
    %v683 = vld [vmem:[#allocation10 + $0x728] sm:$0xff]
    %v684 = vld [vmem:[#allocation10 + $0x730] sm:$0xff]
    %v685 = vld [vmem:[#allocation10 + $0x738] sm:$0xff]
    %v686 = vld [vmem:[#allocation10 + $0x740] sm:$0xff]
    %v687 = vld [vmem:[#allocation10 + $0x748] sm:$0xff]
    %v688 = vld [vmem:[#allocation10 + $0x750] sm:$0xff]
    %v689 = vld [vmem:[#allocation10 + $0x758] sm:$0xff]
    %v690 = vld [vmem:[#allocation10 + $0x760] sm:$0xff]
    %v691 = vld [vmem:[#allocation10 + $0x768] sm:$0xff]
    %v692 = vld [vmem:[#allocation10 + $0x770] sm:$0xff]
    %v693 = vld [vmem:[#allocation10 + $0x778] sm:$0xff]
    %v694 = vld [vmem:[#allocation10 + $0x780] sm:$0xff]
    %v695 = vld [vmem:[#allocation10 + $0x788] sm:$0xff]
    %v696 = vld [vmem:[#allocation10 + $0x790] sm:$0xff]
    %v697 = vld [vmem:[#allocation10 + $0x798] sm:$0xff]
    %v698 = vld [vmem:[#allocation10 + $0x7a0] sm:$0xff]
    %v699 = vld [vmem:[#allocation10 + $0x7a8] sm:$0xff]
    %v700 = vld [vmem:[#allocation10 + $0x7b0] sm:$0xff]
    %v701 = vld [vmem:[#allocation10 + $0x7b8] sm:$0xff]
    %v702 = vld [vmem:[#allocation10 + $0x7c0] sm:$0xff]
    %v703 = vld [vmem:[#allocation10 + $0x7c8] sm:$0xff]
    %v704 = vld [vmem:[#allocation10 + $0x7d0] sm:$0xff]
    %v705 = vld [vmem:[#allocation10 + $0x7d8] sm:$0xff]
    %v706 = vld [vmem:[#allocation10 + $0x7e0] sm:$0xff]
    %v707 = vld [vmem:[#allocation10 + $0x7e8] sm:$0xff]
    %v708 = vld [vmem:[#allocation10 + $0x7f0] sm:$0xff]
    %v709 = vld [vmem:[#allocation10 + $0x7f8] sm:$0xff]
    %v710 = vld [vmem:[%s6] sm:$0xf]
    %v712 = vperm.slane %v710, 0
    %v713 = vperm.slane %v710, 1
    %v714 = vperm.slane %v710, 2
    %v715 = vperm.slane %v710, 3
    %720 = vmatpush.msra.mxu0 %v514
    %721 = vmatpush.msra.mxu0 %v510
    %722 = vmatpush.msra.mxu0 %v506
    %723 = vmatpush.msra.mxu0 %v502
    %724 = vmatpush.msra.mxu0 %v498
    %725 = vmatpush.msra.mxu0 %v494
    %726 = vmatpush.msra.mxu0 %v490
    %727 = vmatpush.msra.mxu0 %v486
    %728 = vmatpush.msra.mxu0 %v482
    %729 = vmatpush.msra.mxu0 %v478
    %730 = vmatpush.msra.mxu0 %v474
    %731 = vmatpush.msra.mxu0 %v470
    %732 = vmatpush.msra.mxu0 %v466
    %733 = vmatpush.msra.mxu0 %v462
    %734 = vmatpush.msra.mxu0 %v458
    %735 = vmatpush.msra.mxu0 %v454
    %736 = vmatmul.f32.gmra.mxu0 %v450
    %v737 = vpop.f32.mrf.mxu0
    %v738 = vadd.f32 %v712, %v737
    %739 = vdwg.mxu0
    %740 = vmatpush.msra.mxu0 %v578
    %741 = vmatpush.msra.mxu0 %v574
    %742 = vmatpush.msra.mxu0 %v570
    %743 = vmatpush.msra.mxu0 %v566
    %744 = vmatpush.msra.mxu0 %v562
    %745 = vmatpush.msra.mxu0 %v558
    %746 = vmatpush.msra.mxu0 %v554
    %747 = vmatpush.msra.mxu0 %v550
    %748 = vmatpush.msra.mxu0 %v546
    %749 = vmatpush.msra.mxu0 %v542
    %750 = vmatpush.msra.mxu0 %v538
    %751 = vmatpush.msra.mxu0 %v534
    %752 = vmatpush.msra.mxu0 %v530
    %753 = vmatpush.msra.mxu0 %v526
    %754 = vmatpush.msra.mxu0 %v522
    %755 = vmatpush.msra.mxu0 %v518
    %756 = vmatmul.f32.gmra.mxu0 %v451
    %v757 = vpop.f32.mrf.mxu0
    %v758 = vadd.f32 %v738, %v757
    %759 = vdwg.mxu0
    %760 = vmatpush.msra.mxu0 %v642
    %761 = vmatpush.msra.mxu0 %v638
    %762 = vmatpush.msra.mxu0 %v634
    %763 = vmatpush.msra.mxu0 %v630
    %764 = vmatpush.msra.mxu0 %v626
    %765 = vmatpush.msra.mxu0 %v622
    %766 = vmatpush.msra.mxu0 %v618
    %767 = vmatpush.msra.mxu0 %v614
    %768 = vmatpush.msra.mxu0 %v610
    %769 = vmatpush.msra.mxu0 %v606
    %770 = vmatpush.msra.mxu0 %v602
    %771 = vmatpush.msra.mxu0 %v598
    %772 = vmatpush.msra.mxu0 %v594
    %773 = vmatpush.msra.mxu0 %v590
    %774 = vmatpush.msra.mxu0 %v586
    %775 = vmatpush.msra.mxu0 %v582
    %776 = vmatmul.f32.gmra.mxu0 %v452
    %v777 = vpop.f32.mrf.mxu0
    %v778 = vadd.f32 %v758, %v777
    %779 = vdwg.mxu0
    %780 = vmatpush.msra.mxu0 %v706
    %781 = vmatpush.msra.mxu0 %v702
    %782 = vmatpush.msra.mxu0 %v698
    %783 = vmatpush.msra.mxu0 %v694
    %784 = vmatpush.msra.mxu0 %v690
    %785 = vmatpush.msra.mxu0 %v686
    %786 = vmatpush.msra.mxu0 %v682
    %787 = vmatpush.msra.mxu0 %v678
    %788 = vmatpush.msra.mxu0 %v674
    %789 = vmatpush.msra.mxu0 %v670
    %790 = vmatpush.msra.mxu0 %v666
    %791 = vmatpush.msra.mxu0 %v662
    %792 = vmatpush.msra.mxu0 %v658
    %793 = vmatpush.msra.mxu0 %v654
    %794 = vmatpush.msra.mxu0 %v650
    %795 = vmatpush.msra.mxu0 %v646
    %796 = vmatmul.f32.gmra.mxu0 %v453
    %v797 = vpop.f32.mrf.mxu0
    %v798 = vadd.f32 %v778, %v797
    %799 = vdwg.mxu0
    %800 = vmatpush.msra.mxu0 %v515
    %801 = vmatpush.msra.mxu0 %v511
    %802 = vmatpush.msra.mxu0 %v507
    %803 = vmatpush.msra.mxu0 %v503
    %804 = vmatpush.msra.mxu0 %v499
    %805 = vmatpush.msra.mxu0 %v495
    %806 = vmatpush.msra.mxu0 %v491
    %807 = vmatpush.msra.mxu0 %v487
    %808 = vmatpush.msra.mxu0 %v483
    %809 = vmatpush.msra.mxu0 %v479
    %810 = vmatpush.msra.mxu0 %v475
    %811 = vmatpush.msra.mxu0 %v471
    %812 = vmatpush.msra.mxu0 %v467
    %813 = vmatpush.msra.mxu0 %v463
    %814 = vmatpush.msra.mxu0 %v459
    %815 = vmatpush.msra.mxu0 %v455
    %816 = vmatmul.f32.gmra.mxu0 %v450
    %v817 = vpop.f32.mrf.mxu0
    %v818 = vadd.f32 %v713, %v817
    %819 = vdwg.mxu0
    %820 = vmatpush.msra.mxu0 %v579
    %821 = vmatpush.msra.mxu0 %v575
    %822 = vmatpush.msra.mxu0 %v571
    %823 = vmatpush.msra.mxu0 %v567
    %824 = vmatpush.msra.mxu0 %v563
    %825 = vmatpush.msra.mxu0 %v559
    %826 = vmatpush.msra.mxu0 %v555
    %827 = vmatpush.msra.mxu0 %v551
    %828 = vmatpush.msra.mxu0 %v547
    %829 = vmatpush.msra.mxu0 %v543
    %830 = vmatpush.msra.mxu0 %v539
    %831 = vmatpush.msra.mxu0 %v535
    %832 = vmatpush.msra.mxu0 %v531
    %833 = vmatpush.msra.mxu0 %v527
    %834 = vmatpush.msra.mxu0 %v523
    %835 = vmatpush.msra.mxu0 %v519
    %836 = vmatmul.f32.gmra.mxu0 %v451
    %v837 = vpop.f32.mrf.mxu0
    %v838 = vadd.f32 %v818, %v837
    %839 = vdwg.mxu0
    %840 = vmatpush.msra.mxu0 %v643
    %841 = vmatpush.msra.mxu0 %v639
    %842 = vmatpush.msra.mxu0 %v635
    %843 = vmatpush.msra.mxu0 %v631
    %844 = vmatpush.msra.mxu0 %v627
    %845 = vmatpush.msra.mxu0 %v623
    %846 = vmatpush.msra.mxu0 %v619
    %847 = vmatpush.msra.mxu0 %v615
    %848 = vmatpush.msra.mxu0 %v611
    %849 = vmatpush.msra.mxu0 %v607
    %850 = vmatpush.msra.mxu0 %v603
    %851 = vmatpush.msra.mxu0 %v599
    %852 = vmatpush.msra.mxu0 %v595
    %853 = vmatpush.msra.mxu0 %v591
    %854 = vmatpush.msra.mxu0 %v587
    %855 = vmatpush.msra.mxu0 %v583
    %856 = vmatmul.f32.gmra.mxu0 %v452
    %v857 = vpop.f32.mrf.mxu0
    %v858 = vadd.f32 %v838, %v857
    %859 = vdwg.mxu0
    %860 = vmatpush.msra.mxu0 %v707
    %861 = vmatpush.msra.mxu0 %v703
    %862 = vmatpush.msra.mxu0 %v699
    %863 = vmatpush.msra.mxu0 %v695
    %864 = vmatpush.msra.mxu0 %v691
    %865 = vmatpush.msra.mxu0 %v687
    %866 = vmatpush.msra.mxu0 %v683
    %867 = vmatpush.msra.mxu0 %v679
    %868 = vmatpush.msra.mxu0 %v675
    %869 = vmatpush.msra.mxu0 %v671
    %870 = vmatpush.msra.mxu0 %v667
    %871 = vmatpush.msra.mxu0 %v663
    %872 = vmatpush.msra.mxu0 %v659
    %873 = vmatpush.msra.mxu0 %v655
    %874 = vmatpush.msra.mxu0 %v651
    %875 = vmatpush.msra.mxu0 %v647
    %876 = vmatmul.f32.gmra.mxu0 %v453
    %v877 = vpop.f32.mrf.mxu0
    %v878 = vadd.f32 %v858, %v877
    %879 = vdwg.mxu0
    %880 = vmatpush.msra.mxu0 %v516
    %881 = vmatpush.msra.mxu0 %v512
    %882 = vmatpush.msra.mxu0 %v508
    %883 = vmatpush.msra.mxu0 %v504
    %884 = vmatpush.msra.mxu0 %v500
    %885 = vmatpush.msra.mxu0 %v496
    %886 = vmatpush.msra.mxu0 %v492
    %887 = vmatpush.msra.mxu0 %v488
    %888 = vmatpush.msra.mxu0 %v484
    %889 = vmatpush.msra.mxu0 %v480
    %890 = vmatpush.msra.mxu0 %v476
    %891 = vmatpush.msra.mxu0 %v472
    %892 = vmatpush.msra.mxu0 %v468
    %893 = vmatpush.msra.mxu0 %v464
    %894 = vmatpush.msra.mxu0 %v460
    %895 = vmatpush.msra.mxu0 %v456
    %896 = vmatmul.f32.gmra.mxu0 %v450
    %v897 = vpop.f32.mrf.mxu0
    %v898 = vadd.f32 %v714, %v897
    %899 = vdwg.mxu0
    %900 = vmatpush.msra.mxu0 %v580
    %901 = vmatpush.msra.mxu0 %v576
    %902 = vmatpush.msra.mxu0 %v572
    %903 = vmatpush.msra.mxu0 %v568
    %904 = vmatpush.msra.mxu0 %v564
    %905 = vmatpush.msra.mxu0 %v560
    %906 = vmatpush.msra.mxu0 %v556
    %907 = vmatpush.msra.mxu0 %v552
    %908 = vmatpush.msra.mxu0 %v548
    %909 = vmatpush.msra.mxu0 %v544
    %910 = vmatpush.msra.mxu0 %v540
    %911 = vmatpush.msra.mxu0 %v536
    %912 = vmatpush.msra.mxu0 %v532
    %913 = vmatpush.msra.mxu0 %v528
    %914 = vmatpush.msra.mxu0 %v524
    %915 = vmatpush.msra.mxu0 %v520
    %916 = vmatmul.f32.gmra.mxu0 %v451
    %v917 = vpop.f32.mrf.mxu0
    %v918 = vadd.f32 %v898, %v917
    %919 = vdwg.mxu0
    %920 = vmatpush.msra.mxu0 %v644
    %921 = vmatpush.msra.mxu0 %v640
    %922 = vmatpush.msra.mxu0 %v636
    %923 = vmatpush.msra.mxu0 %v632
    %924 = vmatpush.msra.mxu0 %v628
    %925 = vmatpush.msra.mxu0 %v624
    %926 = vmatpush.msra.mxu0 %v620
    %927 = vmatpush.msra.mxu0 %v616
    %928 = vmatpush.msra.mxu0 %v612
    %929 = vmatpush.msra.mxu0 %v608
    %930 = vmatpush.msra.mxu0 %v604
    %931 = vmatpush.msra.mxu0 %v600
    %932 = vmatpush.msra.mxu0 %v596
    %933 = vmatpush.msra.mxu0 %v592
    %934 = vmatpush.msra.mxu0 %v588
    %935 = vmatpush.msra.mxu0 %v584
    %936 = vmatmul.f32.gmra.mxu0 %v452
    %v937 = vpop.f32.mrf.mxu0
    %v938 = vadd.f32 %v918, %v937
    %939 = vdwg.mxu0
    %940 = vmatpush.msra.mxu0 %v708
    %941 = vmatpush.msra.mxu0 %v704
    %942 = vmatpush.msra.mxu0 %v700
    %943 = vmatpush.msra.mxu0 %v696
    %944 = vmatpush.msra.mxu0 %v692
    %945 = vmatpush.msra.mxu0 %v688
    %946 = vmatpush.msra.mxu0 %v684
    %947 = vmatpush.msra.mxu0 %v680
    %948 = vmatpush.msra.mxu0 %v676
    %949 = vmatpush.msra.mxu0 %v672
    %950 = vmatpush.msra.mxu0 %v668
    %951 = vmatpush.msra.mxu0 %v664
    %952 = vmatpush.msra.mxu0 %v660
    %953 = vmatpush.msra.mxu0 %v656
    %954 = vmatpush.msra.mxu0 %v652
    %955 = vmatpush.msra.mxu0 %v648
    %956 = vmatmul.f32.gmra.mxu0 %v453
    %v957 = vpop.f32.mrf.mxu0
    %v958 = vadd.f32 %v938, %v957
    %959 = vdwg.mxu0
    %960 = vmatpush.msra.mxu0 %v517
    %961 = vmatpush.msra.mxu0 %v513
    %962 = vmatpush.msra.mxu0 %v509
    %963 = vmatpush.msra.mxu0 %v505
    %964 = vmatpush.msra.mxu0 %v501
    %965 = vmatpush.msra.mxu0 %v497
    %966 = vmatpush.msra.mxu0 %v493
    %967 = vmatpush.msra.mxu0 %v489
    %968 = vmatpush.msra.mxu0 %v485
    %969 = vmatpush.msra.mxu0 %v481
    %970 = vmatpush.msra.mxu0 %v477
    %971 = vmatpush.msra.mxu0 %v473
    %972 = vmatpush.msra.mxu0 %v469
    %973 = vmatpush.msra.mxu0 %v465
    %974 = vmatpush.msra.mxu0 %v461
    %975 = vmatpush.msra.mxu0 %v457
    %976 = vmatmul.f32.gmra.mxu0 %v450
    %v977 = vpop.f32.mrf.mxu0
    %v978 = vadd.f32 %v715, %v977
    %979 = vdwg.mxu0
    %980 = vmatpush.msra.mxu0 %v581
    %981 = vmatpush.msra.mxu0 %v577
    %982 = vmatpush.msra.mxu0 %v573
    %983 = vmatpush.msra.mxu0 %v569
    %984 = vmatpush.msra.mxu0 %v565
    %985 = vmatpush.msra.mxu0 %v561
    %986 = vmatpush.msra.mxu0 %v557
    %987 = vmatpush.msra.mxu0 %v553
    %988 = vmatpush.msra.mxu0 %v549
    %989 = vmatpush.msra.mxu0 %v545
    %990 = vmatpush.msra.mxu0 %v541
    %991 = vmatpush.msra.mxu0 %v537
    %992 = vmatpush.msra.mxu0 %v533
    %993 = vmatpush.msra.mxu0 %v529
    %994 = vmatpush.msra.mxu0 %v525
    %995 = vmatpush.msra.mxu0 %v521
    %996 = vmatmul.f32.gmra.mxu0 %v451
    %v997 = vpop.f32.mrf.mxu0
    %v998 = vadd.f32 %v978, %v997
    %999 = vdwg.mxu0
    %1000 = vmatpush.msra.mxu0 %v645
    %1001 = vmatpush.msra.mxu0 %v641
    %1002 = vmatpush.msra.mxu0 %v637
    %1003 = vmatpush.msra.mxu0 %v633
    %1004 = vmatpush.msra.mxu0 %v629
    %1005 = vmatpush.msra.mxu0 %v625
    %1006 = vmatpush.msra.mxu0 %v621
    %1007 = vmatpush.msra.mxu0 %v617
    %1008 = vmatpush.msra.mxu0 %v613
    %1009 = vmatpush.msra.mxu0 %v609
    %1010 = vmatpush.msra.mxu0 %v605
    %1011 = vmatpush.msra.mxu0 %v601
    %1012 = vmatpush.msra.mxu0 %v597
    %1013 = vmatpush.msra.mxu0 %v593
    %1014 = vmatpush.msra.mxu0 %v589
    %1015 = vmatpush.msra.mxu0 %v585
    %1016 = vmatmul.f32.gmra.mxu0 %v452
    %v1017 = vpop.f32.mrf.mxu0
    %v1018 = vadd.f32 %v998, %v1017
    %1019 = vdwg.mxu0
    %1020 = vmatpush.msra.mxu0 %v709
    %1021 = vmatpush.msra.mxu0 %v705
    %1022 = vmatpush.msra.mxu0 %v701
    %1023 = vmatpush.msra.mxu0 %v697
    %1024 = vmatpush.msra.mxu0 %v693
    %1025 = vmatpush.msra.mxu0 %v689
    %1026 = vmatpush.msra.mxu0 %v685
    %1027 = vmatpush.msra.mxu0 %v681
    %1028 = vmatpush.msra.mxu0 %v677
    %1029 = vmatpush.msra.mxu0 %v673
    %1030 = vmatpush.msra.mxu0 %v669
    %1031 = vmatpush.msra.mxu0 %v665
    %1032 = vmatpush.msra.mxu0 %v661
    %1033 = vmatpush.msra.mxu0 %v657
    %1034 = vmatpush.msra.mxu0 %v653
    %1035 = vmatpush.msra.mxu0 %v649
    %1036 = vmatmul.f32.gmra.mxu0 %v453
    %v1037 = vpop.f32.mrf.mxu0
    %v1038 = vadd.f32 %v1018, %v1037
    %1039 = vdwg.mxu0
    %v1040 = vmax.f32 %v798, 0.0
    %v1041 = vmax.f32 %v878, 0.0
    %v1042 = vmax.f32 %v958, 0.0
    %v1043 = vmax.f32 %v1038, 0.0
    %v1044 = vlaneseq
    %v1045 = vand.u32 %v1044, 127
    %v1046 = vadd.s32 %v1045, 128
    %v1047 = vadd.s32 %v1045, 256
    %v1048 = vadd.s32 %v1045, 384
    %vm1049 = vcmp.ge.s32.totalorder %v1045, 0
    %vm1050 = vcmp.ge.s32.totalorder %v1046, 0
    %vm1051 = vcmp.ge.s32.totalorder %v1047, 0
    %vm1052 = vcmp.ge.s32.totalorder %v1048, 0
    %vm1053 = vcmp.lt.s32.totalorder %v1045, 4
    %vm1054 = vcmp.lt.s32.totalorder %v1046, 4
    %vm1055 = vcmp.lt.s32.totalorder %v1047, 4
    %vm1056 = vcmp.lt.s32.totalorder %v1048, 4
    %vm1057 = vmand %vm1049, %vm1053
    %vm1058 = vmand %vm1050, %vm1054
    %vm1059 = vmand %vm1051, %vm1055
    %vm1060 = vmand %vm1052, %vm1056
    %v1061 = vsel %vm1057, %v1040, 0.0
    %v1062 = vsel %vm1058, %v1041, 0.0
    %v1063 = vsel %vm1059, %v1042, 0.0
    %v1064 = vsel %vm1060, %v1043, 0.0
    %v1065 = vmax.f32 %v1061, %v1062
    %v1066 = vmax.f32 %v1063, %v1064
    %v1067 = vmax.f32 %v1065, %v1066
    %1068 = vmax.xlane.f32.xlu0 %v1067
    %v1069 = vpop.xlane.xlu0 %1068
    %v1070 = vsel %vm1057, %v1069, 0.0
    %v1071 = vsel %vm1058, %v1069, 0.0
    %v1072 = vsel %vm1059, %v1069, 0.0
    %v1073 = vsel %vm1060, %v1069, 0.0
    %vm1074 = vcmp.ge.s32.totalorder %v1045, 4
    %vm1075 = vcmp.ge.s32.totalorder %v1046, 4
    %vm1076 = vcmp.ge.s32.totalorder %v1047, 4
    %vm1077 = vcmp.ge.s32.totalorder %v1048, 4
    %vm1078 = vcmp.lt.s32.totalorder %v1045, 260
    %vm1079 = vcmp.lt.s32.totalorder %v1046, 260
    %vm1080 = vcmp.lt.s32.totalorder %v1047, 260
    %vm1081 = vcmp.lt.s32.totalorder %v1048, 260
    %vm1082 = vmand %vm1074, %vm1078
    %vm1083 = vmand %vm1075, %vm1079
    %vm1084 = vmand %vm1076, %vm1080
    %vm1085 = vmand %vm1077, %vm1081
    %v1086 = vsel %vm1082, %v1040, 0.0
    %v1087 = vsel %vm1083, %v1041, 0.0
    %v1088 = vsel %vm1084, %v1042, 0.0
    %v1089 = vsel %vm1085, %v1043, 0.0
    %v1090 = vmax.f32 %v1086, %v1087
    %v1091 = vmax.f32 %v1088, %v1089
    %v1092 = vmax.f32 %v1090, %v1091
    %1093 = vmax.xlane.f32.xlu0 %v1092
    %v1094 = vpop.xlane.xlu0 %1093
    %v1095 = vsel %vm1082, %v1094, %v1070
    %v1096 = vsel %vm1083, %v1094, %v1071
    %v1097 = vsel %vm1084, %v1094, %v1072
    %v1098 = vsel %vm1085, %v1094, %v1073
    %vm1099 = vcmp.ge.s32.totalorder %v1045, 260
    %vm1100 = vcmp.ge.s32.totalorder %v1046, 260
    %vm1101 = vcmp.ge.s32.totalorder %v1047, 260
    %vm1102 = vcmp.ge.s32.totalorder %v1048, 260
    %vm1103 = vcmp.lt.s32.totalorder %v1045, 324
    %vm1104 = vcmp.lt.s32.totalorder %v1046, 324
    %vm1105 = vcmp.lt.s32.totalorder %v1047, 324
    %vm1106 = vcmp.lt.s32.totalorder %v1048, 324
    %vm1107 = vmand %vm1099, %vm1103
    %vm1108 = vmand %vm1100, %vm1104
    %vm1109 = vmand %vm1101, %vm1105
    %vm1110 = vmand %vm1102, %vm1106
    %v1111 = vsel %vm1107, %v1040, 0.0
    %v1112 = vsel %vm1108, %v1041, 0.0
    %v1113 = vsel %vm1109, %v1042, 0.0
    %v1114 = vsel %vm1110, %v1043, 0.0
    %v1115 = vmax.f32 %v1111, %v1112
    %v1116 = vmax.f32 %v1113, %v1114
    %v1117 = vmax.f32 %v1115, %v1116
    %1118 = vmax.xlane.f32.xlu0 %v1117
    %v1119 = vpop.xlane.xlu0 %1118
    %v1120 = vsel %vm1107, %v1119, %v1095
    %v1121 = vsel %vm1108, %v1119, %v1096
    %v1122 = vsel %vm1109, %v1119, %v1097
    %v1123 = vsel %vm1110, %v1119, %v1098
    %vm1124 = vcmp.ge.s32.totalorder %v1045, 324
    %vm1125 = vcmp.ge.s32.totalorder %v1046, 324
    %vm1126 = vcmp.ge.s32.totalorder %v1047, 324
    %vm1127 = vcmp.ge.s32.totalorder %v1048, 324
    %vm1128 = vcmp.lt.s32.totalorder %v1045, 388
    %vm1129 = vcmp.lt.s32.totalorder %v1046, 388
    %vm1130 = vcmp.lt.s32.totalorder %v1047, 388
    %vm1131 = vcmp.lt.s32.totalorder %v1048, 388
    %vm1132 = vmand %vm1124, %vm1128
    %vm1133 = vmand %vm1125, %vm1129
    %vm1134 = vmand %vm1126, %vm1130
    %vm1135 = vmand %vm1127, %vm1131
    %v1136 = vsel %vm1132, %v1040, 0.0
    %v1137 = vsel %vm1133, %v1041, 0.0
    %v1138 = vsel %vm1134, %v1042, 0.0
    %v1139 = vsel %vm1135, %v1043, 0.0
    %v1140 = vmax.f32 %v1136, %v1137
    %v1141 = vmax.f32 %v1138, %v1139
    %v1142 = vmax.f32 %v1140, %v1141
    %1143 = vmax.xlane.f32.xlu0 %v1142
    %v1144 = vpop.xlane.xlu0 %1143
    %v1145 = vsel %vm1132, %v1144, %v1120
    %v1146 = vsel %vm1133, %v1144, %v1121
    %v1147 = vsel %vm1134, %v1144, %v1122
    %v1148 = vsel %vm1135, %v1144, %v1123
    %vm1149 = vcmp.ge.s32.totalorder %v1045, 388
    %vm1150 = vcmp.ge.s32.totalorder %v1046, 388
    %vm1151 = vcmp.ge.s32.totalorder %v1047, 388
    %vm1152 = vcmp.ge.s32.totalorder %v1048, 388
    %vm1153 = vcmp.lt.s32.totalorder %v1045, 452
    %vm1154 = vcmp.lt.s32.totalorder %v1046, 452
    %vm1155 = vcmp.lt.s32.totalorder %v1047, 452
    %vm1156 = vcmp.lt.s32.totalorder %v1048, 452
    %vm1157 = vmand %vm1149, %vm1153
    %vm1158 = vmand %vm1150, %vm1154
    %vm1159 = vmand %vm1151, %vm1155
    %vm1160 = vmand %vm1152, %vm1156
    %v1161 = vsel %vm1157, %v1040, 0.0
    %v1162 = vsel %vm1158, %v1041, 0.0
    %v1163 = vsel %vm1159, %v1042, 0.0
    %v1164 = vsel %vm1160, %v1043, 0.0
    %v1165 = vmax.f32 %v1161, %v1162
    %v1166 = vmax.f32 %v1163, %v1164
    %v1167 = vmax.f32 %v1165, %v1166
    %1168 = vmax.xlane.f32.xlu0 %v1167
    %v1169 = vpop.xlane.xlu0 %1168
    %v1170 = vsel %vm1157, %v1169, %v1145
    %v1171 = vsel %vm1158, %v1169, %v1146
    %v1172 = vsel %vm1159, %v1169, %v1147
    %v1173 = vsel %vm1160, %v1169, %v1148
    %v1174 = vsub.f32 %v1040, %v1170
    %v1175 = vsub.f32 %v1041, %v1171
    %v1176 = vsub.f32 %v1042, %v1172
    %v1177 = vsub.f32 %v1043, %v1173
    %v1178 = vmul.f32 %v1174, 1.442695
    %v1179 = vpow.pop %v1178
    %v1180 = vmul.f32 %v1175, 1.442695
    %v1181 = vpow.pop %v1180
    %v1182 = vmul.f32 %v1176, 1.442695
    %v1183 = vpow.pop %v1182
    %v1184 = vmul.f32 %v1177, 1.442695
    %v1185 = vpow.pop %v1184
    %v1186 = vsel %vm1057, %v1179, 0.0
    %v1187 = vsel %vm1058, %v1181, 0.0
    %v1188 = vsel %vm1059, %v1183, 0.0
    %v1189 = vsel %vm1060, %v1185, 0.0
    %v1190 = vadd.f32 %v1186, %v1187
    %v1191 = vadd.f32 %v1190, %v1188
    %v1192 = vadd.f32 %v1191, %v1189
    %1193 = vadd.xlane.f32.xlu0 %v1192
    %v1194 = vpop.xlane.xlu0 %1193
    %v1195 = vlog2.pop %v1194
    %v1196 = vmul.f32 %v1195, 0.6931472
    %v1197 = vsel %vm1057, %v1196, 0.0
    %v1198 = vsel %vm1058, %v1196, 0.0
    %v1199 = vsel %vm1059, %v1196, 0.0
    %v1200 = vsel %vm1060, %v1196, 0.0
    %v1201 = vsel %vm1082, %v1179, 0.0
    %v1202 = vsel %vm1083, %v1181, 0.0
    %v1203 = vsel %vm1084, %v1183, 0.0
    %v1204 = vsel %vm1085, %v1185, 0.0
    %v1205 = vadd.f32 %v1201, %v1202
    %v1206 = vadd.f32 %v1205, %v1203
    %v1207 = vadd.f32 %v1206, %v1204
    %1208 = vadd.xlane.f32.xlu0 %v1207
    %v1209 = vpop.xlane.xlu0 %1208
    %v1210 = vlog2.pop %v1209
    %v1211 = vmul.f32 %v1210, 0.6931472
    %v1212 = vsel %vm1082, %v1211, %v1197
    %v1213 = vsel %vm1083, %v1211, %v1198
    %v1214 = vsel %vm1084, %v1211, %v1199
    %v1215 = vsel %vm1085, %v1211, %v1200
    %v1216 = vsel %vm1107, %v1179, 0.0
    %v1217 = vsel %vm1108, %v1181, 0.0
    %v1218 = vsel %vm1109, %v1183, 0.0
    %v1219 = vsel %vm1110, %v1185, 0.0
    %v1220 = vadd.f32 %v1216, %v1217
    %v1221 = vadd.f32 %v1220, %v1218
    %v1222 = vadd.f32 %v1221, %v1219
    %1223 = vadd.xlane.f32.xlu0 %v1222
    %v1224 = vpop.xlane.xlu0 %1223
    %v1225 = vlog2.pop %v1224
    %v1226 = vmul.f32 %v1225, 0.6931472
    %v1227 = vsel %vm1107, %v1226, %v1212
    %v1228 = vsel %vm1108, %v1226, %v1213
    %v1229 = vsel %vm1109, %v1226, %v1214
    %v1230 = vsel %vm1110, %v1226, %v1215
    %v1231 = vsel %vm1132, %v1179, 0.0
    %v1232 = vsel %vm1133, %v1181, 0.0
    %v1233 = vsel %vm1134, %v1183, 0.0
    %v1234 = vsel %vm1135, %v1185, 0.0
    %v1235 = vadd.f32 %v1231, %v1232
    %v1236 = vadd.f32 %v1235, %v1233
    %v1237 = vadd.f32 %v1236, %v1234
    %1238 = vadd.xlane.f32.xlu0 %v1237
    %v1239 = vpop.xlane.xlu0 %1238
    %v1240 = vlog2.pop %v1239
    %v1241 = vmul.f32 %v1240, 0.6931472
    %v1242 = vsel %vm1132, %v1241, %v1227
    %v1243 = vsel %vm1133, %v1241, %v1228
    %v1244 = vsel %vm1134, %v1241, %v1229
    %v1245 = vsel %vm1135, %v1241, %v1230
    %v1246 = vsel %vm1157, %v1179, 0.0
    %v1247 = vsel %vm1158, %v1181, 0.0
    %v1248 = vsel %vm1159, %v1183, 0.0
    %v1249 = vsel %vm1160, %v1185, 0.0
    %v1250 = vadd.f32 %v1246, %v1247
    %v1251 = vadd.f32 %v1250, %v1248
    %v1252 = vadd.f32 %v1251, %v1249
    %1253 = vadd.xlane.f32.xlu0 %v1252
    %v1254 = vpop.xlane.xlu0 %1253
    %v1255 = vlog2.pop %v1254
    %v1256 = vmul.f32 %v1255, 0.6931472
    %v1257 = vsel %vm1157, %v1256, %v1242
    %v1258 = vsel %vm1158, %v1256, %v1243
    %v1259 = vsel %vm1159, %v1256, %v1244
    %v1260 = vsel %vm1160, %v1256, %v1245
    %v1261 = vsub.f32 %v1174, %v1257
    %v1262 = vsub.f32 %v1175, %v1258
    %v1263 = vsub.f32 %v1176, %v1259
    %v1264 = vsub.f32 %v1177, %v1260
    %1265 = vst [vmem:[#allocation11] sm:$0xff] %v1261
    %1266 = vst [vmem:[#allocation11 + $0x8] sm:$0xff] %v1262
    %1267 = vst [vmem:[#allocation11 + $0x10] sm:$0xff] %v1263
    %vm1268 = vcmask 556032
    %1269 = vst.msk [vmem:[#allocation11 + $0x18] sm:$0xff] %vm1268, %v1264
    // Predicated region
    $region50: #{tpu_custom_call.1} parent=1 // pred_check
      _
    $region51: #{tpu_custom_call.1} parent=1 // pred_check_branch
      %1271 = sbr.rel (0) target = $region53
    $region52: #{tpu_custom_call.1} parent=1 // pred_region
      %1273 = vsyncadd [#allocation4], 0
      %s1275 = sshll.u32 [#allocation11], 4
      %s1276 = int_to_ptr.vmem [resolvable:$true] %s1275
      %s1277 = sshll.u32 %s7, 4
      %s1278 = int_to_ptr.hbm [resolvable:$true] %s1277
      %1280 = dma.vmem_to_hbm [thread:$0]  %s1276, 512, %s1278, [#allocation4]
    $region53: #{tpu_custom_call.1} parent=1 // pred_fallthru
      _
    // Predicated region
    $region54: #{tpu_custom_call.1} parent=1 // pred_check
      _
    $region55: #{tpu_custom_call.1} parent=1 // pred_check_branch
      %1282 = sbr.rel (0) target = $region57
    $region56: #{tpu_custom_call.1} parent=1 // pred_region
      %1284 = vsyncadd [#allocation13], 0
      %s1286 = sshll.u32 [#allocation12], 4
      %s1287 = int_to_ptr.vmem [resolvable:$true] %s1286
      %s1288 = sshll.u32 %s8, 4
      %s1289 = int_to_ptr.hbm [resolvable:$true] %s1288
      %1291 = dma.vmem_to_hbm [thread:$0]  %s1287, 128, %s1289, [#allocation13]
    $region57: #{tpu_custom_call.1} parent=1 // pred_fallthru
      _
    // Predicated region
    $region58: #{tpu_custom_call.1} parent=1 // pred_check
      _
    $region59: #{tpu_custom_call.1} parent=1 // pred_check_branch
      %1293 = sbr.rel (0) target = $region61
    $region60: #{tpu_custom_call.1} parent=1 // pred_region
      %1295 = dma.done [#allocation4], 512
    $region61: #{tpu_custom_call.1} parent=1 // pred_fallthru
      _
    // Predicated region
    $region62: #{tpu_custom_call.1} parent=1 // pred_check
      _
    $region63: #{tpu_custom_call.1} parent=1 // pred_check_branch
      %1297 = sbr.rel (0) target = $region65
    $region64: #{tpu_custom_call.1} parent=1 // pred_region
      %1299 = dma.done [#allocation13], 128
    $region65: #{tpu_custom_call.1} parent=1 // pred_fallthru
      _
    %1300 = vsyncpa [#allocation3], 1
    %1301 = vsyncpa [#allocation6], 1
    %1302 = vsyncpa [#allocation9], 1
    %1303 = vsyncpa [#allocation4], 1
    %1304 = vsyncpa [#allocation13], 1

</llo_original>
